<compile_context>
chip_gen: v7x
topology: tpu7x:2x2x1
jax: 0.10.0
libtpu: 0.0.40
codegen_flags: <defaults>
</compile_context>

<pallas_src>
import functools
import math

import jax
import jax.numpy as jnp
from jax.experimental import pallas as pl
from jax.experimental.pallas import tpu as pltpu


# ----------------------------------------------------------------------------
# SpectralNorm: power-iteration normalization of the conv weight.
# Done once at parameter-preparation time in plain JAX (weight preprocessing),
# matching eval-time PyTorch SpectralNorm up to power-iteration convergence.
# ----------------------------------------------------------------------------
def spectral_norm(w, n_iter=30):
    m = w.reshape(w.shape[0], -1)
    v = jnp.ones((m.shape[1],), jnp.float32) / math.sqrt(m.shape[1])
    u = jnp.ones((m.shape[0],), jnp.float32) / math.sqrt(m.shape[0])
    for _ in range(n_iter):
        u = m @ v
        u = u / (jnp.linalg.norm(u) + 1e-12)
        v = m.T @ u
        v = v / (jnp.linalg.norm(v) + 1e-12)
    sigma = u @ (m @ v)
    return w / sigma


def prepare_params(w_sn, bias):
    """One-time weight re-layout (outside the forward): no per-call padded copies."""
    C2, Cin, KH, KW = w_sn.shape
    # (2*Cout, Cin, KH, KW) -> (KH*KW, Cin, 2*Cout), bf16 for the MXU (f32 accumulation in-kernel)
    w_mat = jnp.transpose(w_sn, (2, 3, 1, 0)).reshape(KH * KW, Cin, C2).astype(jnp.bfloat16)
    b_row = bias.reshape(1, C2).astype(jnp.float32)
    return {"w": w_mat, "b": b_row}


# ----------------------------------------------------------------------------
# Fused conv (+ bias) kernel: k_h*k_w shifted sub-matmuls, f32 accumulation.
# ----------------------------------------------------------------------------
def _subpixel_conv_kernel(x_ref, w_ref, b_ref, o_ref, *, TH, KH, KW, WO, CIN, C2):
    # x_ref: (Hp, Wp, CIN) bf16   padded channels-last image of one batch element
    # w_ref: (KH*KW, CIN, C2) bf16
    # b_ref: (1, C2) f32
    # o_ref: (TH*WO, C2) f32      TH output rows, channels-last (lane-dense)
    h0 = pl.program_id(1) * TH
    acc = jnp.zeros((TH * WO, C2), jnp.float32)
    for dh in range(KH):
        for dw in range(KW):
            xs = x_ref[pl.ds(h0 + dh, TH), pl.ds(dw, WO), :]          # (TH, WO, CIN)
            xs = xs.reshape(TH * WO, CIN)
            acc = acc + jnp.dot(xs, w_ref[dh * KW + dw],
                                preferred_element_type=jnp.float32)
    o_ref[...] = acc + b_ref[...]


def subpixel2d_forward(params, x, *, out_channel, k_h, k_w, pad_h, pad_w, block_h=8):
    """x: (B, Cin, H, W) float32 (torch NCHW) -> (B, out_channel, H', 2*W') float32."""
    B, Cin, H, W = x.shape
    Ho = H + 2 * pad_h - k_h + 1
    Wo = W + 2 * pad_w - k_w + 1
    C2 = 2 * out_channel
    Hp, Wp = H + 2 * pad_h, W + 2 * pad_w

    # Channels-last + spatial pad + bf16 cast, once at the module boundary.
    # (Between layers of a bigger net you would keep NHWC and skip this transpose.)
    xl = jnp.transpose(x, (0, 2, 3, 1))
    xl = jnp.pad(xl, ((0, 0), (pad_h, pad_h), (pad_w, pad_w), (0, 0))).astype(jnp.bfloat16)

    TH = block_h if (Ho % block_h == 0) else Ho
    nHB = Ho // TH

    kernel = functools.partial(_subpixel_conv_kernel, TH=TH, KH=k_h, KW=k_w,
                               WO=Wo, CIN=Cin, C2=C2)

    out = pl.pallas_call(
        kernel,
        out_shape=jax.ShapeDtypeStruct((B, Ho * Wo, C2), jnp.float32),
        grid_spec=pltpu.PrefetchScalarGridSpec(
            num_scalar_prefetch=0,
            grid=(B, nHB),
            in_specs=[
                # Full padded image of batch b; block index is constant across the row-block
                # axis so it is fetched once per batch element and re-used by every row block.
                pl.BlockSpec((None, Hp, Wp, Cin), lambda b, hb: (b, 0, 0, 0)),
                pl.BlockSpec((k_h * k_w, Cin, C2), lambda b, hb: (0, 0, 0)),
                pl.BlockSpec((1, C2), lambda b, hb: (0, 0)),
            ],
            out_specs=pl.BlockSpec((None, TH * Wo, C2), lambda b, hb: (b, hb, 0)),
        ),
        compiler_params=pltpu.CompilerParams(
            dimension_semantics=("parallel", "parallel"),
            vmem_limit_bytes=32 * 1024 * 1024,
        ),
    )(xl, params["w"], params["b"])

    # Sub-pixel shuffle along width is a zero-cost reshape of the channels-last conv output:
    #   (B, Ho*Wo, 2*Cout)  ==  (B, Ho, 2*Wo, Cout)   (channel order (shuffle, cout) as in torch)
    y_nhwc = out.reshape(B, Ho, 2 * Wo, out_channel)
    # Final transpose to the module's NCHW return layout (module boundary only).
    return jnp.transpose(y_nhwc, (0, 3, 1, 2))


if __name__ == "__main__":
    # Small shapes consistent with the module; 2*out_channel = 128 keeps the matmul N lane-dense.
    B, Cin, H, W = 2, 16, 16, 16
    out_channel, k_h, k_w, pad_h, pad_w = 64, 3, 3, 1, 1

    key = jax.random.PRNGKey(0)
    kw_, kb_, kx_ = jax.random.split(key, 3)
    w_raw = jax.random.normal(kw_, (2 * out_channel, Cin, k_h, k_w), jnp.float32) / math.sqrt(Cin * k_h * k_w)
    bias = jax.random.normal(kb_, (2 * out_channel,), jnp.float32) * 0.01
    x = jax.random.normal(kx_, (B, Cin, H, W), jnp.float32)

    w_sn = spectral_norm(w_raw)
    params = prepare_params(w_sn, bias)

    y = subpixel2d_forward(params, x, out_channel=out_channel,
                           k_h=k_h, k_w=k_w, pad_h=pad_h, pad_w=pad_w)
    y = jax.block_until_ready(y)

    # Pure-JAX reference (f32 conv + torch-style view/permute/view pixel shuffle).
    conv = jax.lax.conv_general_dilated(
        x, w_sn, window_strides=(1, 1),
        padding=((pad_h, pad_h), (pad_w, pad_w)),
        dimension_numbers=("NCHW", "OIHW", "NCHW")) + bias[None, :, None, None]
    Ho, Wo = conv.shape[2], conv.shape[3]
    ref = conv.reshape(B, 2, out_channel, Ho, Wo).transpose(0, 2, 3, 4, 1).reshape(B, out_channel, Ho, 2 * Wo)

    assert y.shape == ref.shape == (B, out_channel, Ho, 2 * Wo)
    assert y.dtype == jnp.float32
    # bf16 MXU inputs with f32 accumulation -> loose tolerance vs f32 reference
    assert jnp.allclose(y, ref, atol=5e-2, rtol=5e-2), float(jnp.max(jnp.abs(y - ref)))
    print("KERNEL_OK")
</pallas_src>

<mosaic_0001>
module attributes {stable_mosaic.version = 11 : i64} {
  func.func @_subpixel_conv_kernel(%arg0: i32, %arg1: i32, %arg2: memref<1x18x18x16xbf16, #tpu.memory_space<vmem>>, %arg3: memref<9x16x128xbf16, #tpu.memory_space<vmem>>, %arg4: memref<1x128xf32, #tpu.memory_space<vmem>>, %arg5: memref<1x128x128xf32, #tpu.memory_space<vmem>>) attributes {dimension_semantics = [#tpu.dimension_semantics<parallel>, #tpu.dimension_semantics<parallel>], iteration_bounds = array<i64: 2, 2>, scalar_prefetch = 0 : i64, scratch_operands = 0 : i64, tpu.core_type = #tpu.core_type<tc>, window_params = [{transform_indices = @transform_0, window_bounds = array<i64: 1, 18, 18, 16>}, {pipeline_mode = #tpu.pipeline_mode<synchronous>, transform_indices = @transform_1, window_bounds = array<i64: 9, 16, 128>}, {pipeline_mode = #tpu.pipeline_mode<synchronous>, transform_indices = @transform_2, window_bounds = array<i64: 1, 128>}, {transform_indices = @transform_3, window_bounds = array<i64: 1, 128, 128>}]} {
    %c8_i32 = arith.constant 8 : i32
    %0 = arith.muli %arg1, %c8_i32 : i32
    %cst = arith.constant 0.000000e+00 : f32
    %1 = vector.broadcast %cst : f32 to vector<128x128xf32>
    %c0_i32 = arith.constant 0 : i32
    %2 = arith.addi %0, %c0_i32 : i32
    %c0 = arith.constant 0 : index
    %3 = arith.index_cast %2 : i32 to index
    %c0_0 = arith.constant 0 : index
    %c0_1 = arith.constant 0 : index
    %4 = vector.load %arg2[%c0, %3, %c0_0, %c0_1] : memref<1x18x18x16xbf16, #tpu.memory_space<vmem>>, vector<1x8x16x16xbf16>
    %5 = vector.shape_cast %4 : vector<1x8x16x16xbf16> to vector<8x16x16xbf16>
    %6 = vector.shape_cast %5 : vector<8x16x16xbf16> to vector<128x16xbf16>
    %c0_2 = arith.constant 0 : index
    %c0_3 = arith.constant 0 : index
    %c0_4 = arith.constant 0 : index
    %7 = vector.load %arg3[%c0_2, %c0_3, %c0_4] : memref<9x16x128xbf16, #tpu.memory_space<vmem>>, vector<1x16x128xbf16>
    %8 = vector.shape_cast %7 : vector<1x16x128xbf16> to vector<16x128xbf16>
    %cst_5 = arith.constant dense<0.000000e+00> : vector<128x128xf32>
    %9 = tpu.matmul %6, %8, %cst_5 {dimension_numbers = #tpu.dot_dimension_numbers<[1], [0], [0], [1], [0, 0, 1, 1], [], []>} : vector<128x16xbf16>, vector<16x128xbf16>, vector<128x128xf32> -> vector<128x128xf32>
    %10 = arith.addf %1, %9 : vector<128x128xf32>
    %c0_i32_6 = arith.constant 0 : i32
    %11 = arith.addi %0, %c0_i32_6 : i32
    %c0_7 = arith.constant 0 : index
    %12 = arith.index_cast %11 : i32 to index
    %c1 = arith.constant 1 : index
    %c0_8 = arith.constant 0 : index
    %13 = vector.load %arg2[%c0_7, %12, %c1, %c0_8] : memref<1x18x18x16xbf16, #tpu.memory_space<vmem>>, vector<1x8x16x16xbf16>
    %14 = vector.shape_cast %13 : vector<1x8x16x16xbf16> to vector<8x16x16xbf16>
    %15 = vector.shape_cast %14 : vector<8x16x16xbf16> to vector<128x16xbf16>
    %c1_9 = arith.constant 1 : index
    %c0_10 = arith.constant 0 : index
    %c0_11 = arith.constant 0 : index
    %16 = vector.load %arg3[%c1_9, %c0_10, %c0_11] : memref<9x16x128xbf16, #tpu.memory_space<vmem>>, vector<1x16x128xbf16>
    %17 = vector.shape_cast %16 : vector<1x16x128xbf16> to vector<16x128xbf16>
    %cst_12 = arith.constant dense<0.000000e+00> : vector<128x128xf32>
    %18 = tpu.matmul %15, %17, %cst_12 {dimension_numbers = #tpu.dot_dimension_numbers<[1], [0], [0], [1], [0, 0, 1, 1], [], []>} : vector<128x16xbf16>, vector<16x128xbf16>, vector<128x128xf32> -> vector<128x128xf32>
    %19 = arith.addf %10, %18 : vector<128x128xf32>
    %c0_i32_13 = arith.constant 0 : i32
    %20 = arith.addi %0, %c0_i32_13 : i32
    %c0_14 = arith.constant 0 : index
    %21 = arith.index_cast %20 : i32 to index
    %c2 = arith.constant 2 : index
    %c0_15 = arith.constant 0 : index
    %22 = vector.load %arg2[%c0_14, %21, %c2, %c0_15] : memref<1x18x18x16xbf16, #tpu.memory_space<vmem>>, vector<1x8x16x16xbf16>
    %23 = vector.shape_cast %22 : vector<1x8x16x16xbf16> to vector<8x16x16xbf16>
    %24 = vector.shape_cast %23 : vector<8x16x16xbf16> to vector<128x16xbf16>
    %c2_16 = arith.constant 2 : index
    %c0_17 = arith.constant 0 : index
    %c0_18 = arith.constant 0 : index
    %25 = vector.load %arg3[%c2_16, %c0_17, %c0_18] : memref<9x16x128xbf16, #tpu.memory_space<vmem>>, vector<1x16x128xbf16>
    %26 = vector.shape_cast %25 : vector<1x16x128xbf16> to vector<16x128xbf16>
    %cst_19 = arith.constant dense<0.000000e+00> : vector<128x128xf32>
    %27 = tpu.matmul %24, %26, %cst_19 {dimension_numbers = #tpu.dot_dimension_numbers<[1], [0], [0], [1], [0, 0, 1, 1], [], []>} : vector<128x16xbf16>, vector<16x128xbf16>, vector<128x128xf32> -> vector<128x128xf32>
    %28 = arith.addf %19, %27 : vector<128x128xf32>
    %c1_i32 = arith.constant 1 : i32
    %29 = arith.addi %0, %c1_i32 : i32
    %c0_20 = arith.constant 0 : index
    %30 = arith.index_cast %29 : i32 to index
    %c0_21 = arith.constant 0 : index
    %c0_22 = arith.constant 0 : index
    %31 = vector.load %arg2[%c0_20, %30, %c0_21, %c0_22] : memref<1x18x18x16xbf16, #tpu.memory_space<vmem>>, vector<1x8x16x16xbf16>
    %32 = vector.shape_cast %31 : vector<1x8x16x16xbf16> to vector<8x16x16xbf16>
    %33 = vector.shape_cast %32 : vector<8x16x16xbf16> to vector<128x16xbf16>
    %c3 = arith.constant 3 : index
    %c0_23 = arith.constant 0 : index
    %c0_24 = arith.constant 0 : index
    %34 = vector.load %arg3[%c3, %c0_23, %c0_24] : memref<9x16x128xbf16, #tpu.memory_space<vmem>>, vector<1x16x128xbf16>
    %35 = vector.shape_cast %34 : vector<1x16x128xbf16> to vector<16x128xbf16>
    %cst_25 = arith.constant dense<0.000000e+00> : vector<128x128xf32>
    %36 = tpu.matmul %33, %35, %cst_25 {dimension_numbers = #tpu.dot_dimension_numbers<[1], [0], [0], [1], [0, 0, 1, 1], [], []>} : vector<128x16xbf16>, vector<16x128xbf16>, vector<128x128xf32> -> vector<128x128xf32>
    %37 = arith.addf %28, %36 : vector<128x128xf32>
    %c1_i32_26 = arith.constant 1 : i32
    %38 = arith.addi %0, %c1_i32_26 : i32
    %c0_27 = arith.constant 0 : index
    %39 = arith.index_cast %38 : i32 to index
    %c1_28 = arith.constant 1 : index
    %c0_29 = arith.constant 0 : index
    %40 = vector.load %arg2[%c0_27, %39, %c1_28, %c0_29] : memref<1x18x18x16xbf16, #tpu.memory_space<vmem>>, vector<1x8x16x16xbf16>
    %41 = vector.shape_cast %40 : vector<1x8x16x16xbf16> to vector<8x16x16xbf16>
    %42 = vector.shape_cast %41 : vector<8x16x16xbf16> to vector<128x16xbf16>
    %c4 = arith.constant 4 : index
    %c0_30 = arith.constant 0 : index
    %c0_31 = arith.constant 0 : index
    %43 = vector.load %arg3[%c4, %c0_30, %c0_31] : memref<9x16x128xbf16, #tpu.memory_space<vmem>>, vector<1x16x128xbf16>
    %44 = vector.shape_cast %43 : vector<1x16x128xbf16> to vector<16x128xbf16>
    %cst_32 = arith.constant dense<0.000000e+00> : vector<128x128xf32>
    %45 = tpu.matmul %42, %44, %cst_32 {dimension_numbers = #tpu.dot_dimension_numbers<[1], [0], [0], [1], [0, 0, 1, 1], [], []>} : vector<128x16xbf16>, vector<16x128xbf16>, vector<128x128xf32> -> vector<128x128xf32>
    %46 = arith.addf %37, %45 : vector<128x128xf32>
    %c1_i32_33 = arith.constant 1 : i32
    %47 = arith.addi %0, %c1_i32_33 : i32
    %c0_34 = arith.constant 0 : index
    %48 = arith.index_cast %47 : i32 to index
    %c2_35 = arith.constant 2 : index
    %c0_36 = arith.constant 0 : index
    %49 = vector.load %arg2[%c0_34, %48, %c2_35, %c0_36] : memref<1x18x18x16xbf16, #tpu.memory_space<vmem>>, vector<1x8x16x16xbf16>
    %50 = vector.shape_cast %49 : vector<1x8x16x16xbf16> to vector<8x16x16xbf16>
    %51 = vector.shape_cast %50 : vector<8x16x16xbf16> to vector<128x16xbf16>
    %c5 = arith.constant 5 : index
    %c0_37 = arith.constant 0 : index
    %c0_38 = arith.constant 0 : index
    %52 = vector.load %arg3[%c5, %c0_37, %c0_38] : memref<9x16x128xbf16, #tpu.memory_space<vmem>>, vector<1x16x128xbf16>
    %53 = vector.shape_cast %52 : vector<1x16x128xbf16> to vector<16x128xbf16>
    %cst_39 = arith.constant dense<0.000000e+00> : vector<128x128xf32>
    %54 = tpu.matmul %51, %53, %cst_39 {dimension_numbers = #tpu.dot_dimension_numbers<[1], [0], [0], [1], [0, 0, 1, 1], [], []>} : vector<128x16xbf16>, vector<16x128xbf16>, vector<128x128xf32> -> vector<128x128xf32>
    %55 = arith.addf %46, %54 : vector<128x128xf32>
    %c2_i32 = arith.constant 2 : i32
    %56 = arith.addi %0, %c2_i32 : i32
    %c0_40 = arith.constant 0 : index
    %57 = arith.index_cast %56 : i32 to index
    %c0_41 = arith.constant 0 : index
    %c0_42 = arith.constant 0 : index
    %58 = vector.load %arg2[%c0_40, %57, %c0_41, %c0_42] : memref<1x18x18x16xbf16, #tpu.memory_space<vmem>>, vector<1x8x16x16xbf16>
    %59 = vector.shape_cast %58 : vector<1x8x16x16xbf16> to vector<8x16x16xbf16>
    %60 = vector.shape_cast %59 : vector<8x16x16xbf16> to vector<128x16xbf16>
    %c6 = arith.constant 6 : index
    %c0_43 = arith.constant 0 : index
    %c0_44 = arith.constant 0 : index
    %61 = vector.load %arg3[%c6, %c0_43, %c0_44] : memref<9x16x128xbf16, #tpu.memory_space<vmem>>, vector<1x16x128xbf16>
    %62 = vector.shape_cast %61 : vector<1x16x128xbf16> to vector<16x128xbf16>
    %cst_45 = arith.constant dense<0.000000e+00> : vector<128x128xf32>
    %63 = tpu.matmul %60, %62, %cst_45 {dimension_numbers = #tpu.dot_dimension_numbers<[1], [0], [0], [1], [0, 0, 1, 1], [], []>} : vector<128x16xbf16>, vector<16x128xbf16>, vector<128x128xf32> -> vector<128x128xf32>
    %64 = arith.addf %55, %63 : vector<128x128xf32>
    %c2_i32_46 = arith.constant 2 : i32
    %65 = arith.addi %0, %c2_i32_46 : i32
    %c0_47 = arith.constant 0 : index
    %66 = arith.index_cast %65 : i32 to index
    %c1_48 = arith.constant 1 : index
    %c0_49 = arith.constant 0 : index
    %67 = vector.load %arg2[%c0_47, %66, %c1_48, %c0_49] : memref<1x18x18x16xbf16, #tpu.memory_space<vmem>>, vector<1x8x16x16xbf16>
    %68 = vector.shape_cast %67 : vector<1x8x16x16xbf16> to vector<8x16x16xbf16>
    %69 = vector.shape_cast %68 : vector<8x16x16xbf16> to vector<128x16xbf16>
    %c7 = arith.constant 7 : index
    %c0_50 = arith.constant 0 : index
    %c0_51 = arith.constant 0 : index
    %70 = vector.load %arg3[%c7, %c0_50, %c0_51] : memref<9x16x128xbf16, #tpu.memory_space<vmem>>, vector<1x16x128xbf16>
    %71 = vector.shape_cast %70 : vector<1x16x128xbf16> to vector<16x128xbf16>
    %cst_52 = arith.constant dense<0.000000e+00> : vector<128x128xf32>
    %72 = tpu.matmul %69, %71, %cst_52 {dimension_numbers = #tpu.dot_dimension_numbers<[1], [0], [0], [1], [0, 0, 1, 1], [], []>} : vector<128x16xbf16>, vector<16x128xbf16>, vector<128x128xf32> -> vector<128x128xf32>
    %73 = arith.addf %64, %72 : vector<128x128xf32>
    %c2_i32_53 = arith.constant 2 : i32
    %74 = arith.addi %0, %c2_i32_53 : i32
    %c0_54 = arith.constant 0 : index
    %75 = arith.index_cast %74 : i32 to index
    %c2_55 = arith.constant 2 : index
    %c0_56 = arith.constant 0 : index
    %76 = vector.load %arg2[%c0_54, %75, %c2_55, %c0_56] : memref<1x18x18x16xbf16, #tpu.memory_space<vmem>>, vector<1x8x16x16xbf16>
    %77 = vector.shape_cast %76 : vector<1x8x16x16xbf16> to vector<8x16x16xbf16>
    %78 = vector.shape_cast %77 : vector<8x16x16xbf16> to vector<128x16xbf16>
    %c8 = arith.constant 8 : index
    %c0_57 = arith.constant 0 : index
    %c0_58 = arith.constant 0 : index
    %79 = vector.load %arg3[%c8, %c0_57, %c0_58] : memref<9x16x128xbf16, #tpu.memory_space<vmem>>, vector<1x16x128xbf16>
    %80 = vector.shape_cast %79 : vector<1x16x128xbf16> to vector<16x128xbf16>
    %cst_59 = arith.constant dense<0.000000e+00> : vector<128x128xf32>
    %81 = tpu.matmul %78, %80, %cst_59 {dimension_numbers = #tpu.dot_dimension_numbers<[1], [0], [0], [1], [0, 0, 1, 1], [], []>} : vector<128x16xbf16>, vector<16x128xbf16>, vector<128x128xf32> -> vector<128x128xf32>
    %82 = arith.addf %73, %81 : vector<128x128xf32>
    %c0_60 = arith.constant 0 : index
    %c0_61 = arith.constant 0 : index
    %83 = vector.load %arg4[%c0_60, %c0_61] : memref<1x128xf32, #tpu.memory_space<vmem>>, vector<1x128xf32>
    %84 = vector.broadcast %83 : vector<1x128xf32> to vector<128x128xf32>
    %85 = arith.addf %82, %84 : vector<128x128xf32>
    %c0_62 = arith.constant 0 : index
    %c0_63 = arith.constant 0 : index
    %c0_64 = arith.constant 0 : index
    %86 = vector.load %arg5[%c0_62, %c0_63, %c0_64] : memref<1x128x128xf32, #tpu.memory_space<vmem>>, vector<1x128x128xf32>
    %87 = vector.shape_cast %86 : vector<1x128x128xf32> to vector<128x128xf32>
    %88 = vector.shape_cast %85 : vector<128x128xf32> to vector<1x128x128xf32>
    tpu.vector_store %arg5[%c0_62, %c0_63, %c0_64], %88 {strides = array<i32>} : memref<1x128x128xf32, #tpu.memory_space<vmem>>, vector<1x128x128xf32>,
    return
  }
  func.func @transform_0(%arg0: i32, %arg1: i32) -> (i32, i32, i32, i32) {
    %c0_i32 = arith.constant 0 : i32
    %c0_i32_0 = arith.constant 0 : i32
    %c0_i32_1 = arith.constant 0 : i32
    %c0_i32_2 = arith.constant 0 : i32
    return %arg0, %c0_i32, %c0_i32_0, %c0_i32_1 : i32, i32, i32, i32
  }
  func.func @transform_1(%arg0: i32, %arg1: i32) -> (i32, i32, i32) {
    %c0_i32 = arith.constant 0 : i32
    %c0_i32_0 = arith.constant 0 : i32
    %c0_i32_1 = arith.constant 0 : i32
    %c0_i32_2 = arith.constant 0 : i32
    return %c0_i32, %c0_i32_0, %c0_i32_1 : i32, i32, i32
  }
  func.func @transform_2(%arg0: i32, %arg1: i32) -> (i32, i32) {
    %c0_i32 = arith.constant 0 : i32
    %c0_i32_0 = arith.constant 0 : i32
    %c0_i32_1 = arith.constant 0 : i32
    return %c0_i32, %c0_i32_0 : i32, i32
  }
  func.func @transform_3(%arg0: i32, %arg1: i32) -> (i32, i32, i32) {
    %c0_i32 = arith.constant 0 : i32
    %c0_i32_0 = arith.constant 0 : i32
    return %arg0, %arg1, %c0_i32 : i32, i32, i32
  }
}

</mosaic_0001>

<llo_original>
// kernel: tpu_custom_call.1
$region0: #{tpu_custom_call.1}
  #allocation0 [shape = 'u32[]', space=smem, size = 0x4, offset = 0x4, fixed_abs, tag = 'smem constant byte address 0x4 - core index']
  #allocation1 [shape = 'u32[144,128]{1,0:T(1,128)}', space=vmem, size = 0x12000, scoped, tag = 'internal scratch']
  %s0 = inlined_call_operand.vmem [shape: bf16[2,18,18,16], index: 0, kind: input, shape index: {}]
  %s1 = inlined_call_operand.vmem [shape: bf16[9,16,128], index: 1, kind: input, shape index: {}]
  %s2 = inlined_call_operand.vmem [shape: f32[1,128], index: 2, kind: input, shape index: {}]
  %s3 = inlined_call_operand.hbm [shape: f32[2,256,128], index: 3, kind: output, shape index: {}]
  %s4 = sld [smem:[#allocation0]]
  $region45: #{tpu_custom_call.1} parent=0
    _
  %s6 = ssub.s32 1, %s4
  %s7 = scalar_select 0, %s6, %s4
  $region1: #{tpu_custom_call.1} parent=0
    #allocation2 [shape = 'u8[131072]{0}', space=vmem, size = 0x20000, scoped, tag = 'output window, operand 0']
    #allocation3 [shape = 's32[2]{0}', space=sflag, size = 0x8, scoped, tag = 'scoped memory for tpu_custom_call.1']
    %8 = vsyncpa [#allocation3], 0
    %s9 = scalar_lea.sflag [#allocation3], 1
    %10 = vsyncpa %s9, 0
    loop: start=0, step=1, limit=6
    $region2: #{tpu_custom_call.1} parent=1 // loop_pre_header
      _
    $region3: #{tpu_custom_call.1} parent=1 // loop_header
      %s12 = sphi 0, %s16
      %p13 = scmp.ge.s32.totalorder %s12, 6
      %s19 = sphi 0, %s31
      %s20 = sphi 0, %s27
      %s21 = sphi 0, %s19
      %s22 = sphi 0, %s20
      %s23 = sphi 0, %s21
      %s24 = sphi 0, %s22
      %s34 = sphi 0, %s36
      %s37 = sphi 0, %s34
      %s38 = sphi 0, %s37
      %s54 = sphi 0, %s38
      %s58 = sphi 0, %s58
      %s60 = sphi 0, %s58
      %s61 = sphi 0, %s60
      %s75 = sphi 0, %s61
      %s79 = sphi 0, %s79
      %s81 = sphi 0, %s79
      %s82 = sphi 0, %s81
      %s96 = sphi 0, %s82
      %s104 = sphi 0, %s106
      %s107 = sphi 0, %s104
      %s108 = sphi 0, %s107
      %s124 = sphi 0, %s108
    $region4: #{tpu_custom_call.1} parent=1 // loop_header_branch
      %15 = sbr.rel (%p13) target = $region8
    $region5: #{tpu_custom_call.1} parent=1 // loop_body
      %s17 = ssub.s32 %s12, 1
      %s18 = ssub.s32 %s12, 2
      %s25 = sadd.s32 1, %s20
      %p26 = scmp.ge.s32.totalorder %s25, 2
      %s27 = scalar_select %p26, 0, %s25
      %s28 = sadd.s32 1, %s19
      %s29 = scalar_select %p26, %s28, %s19
      %p30 = scmp.ge.s32.totalorder %s29, 2
      %s31 = scalar_select %p30, 0, %s29
      %s32 = ssub.s32 %s19, %s31
      %p33 = scmp.eq.s32.totalorder %s32, 0
      %s35 = sadd.s32 %s34, 1
      %s36 = scalar_select %p33, %s34, %s35
      %p39 = pneg %p33
      %p40 = scmp.eq.s32.totalorder %s12, 3
      %p41 = por %p39, %p40
      %p42 = scmp.ne.s32.totalorder %s34, %s37
      %p43 = scmp.eq.s32.totalorder %s12, 0
      %p44 = por %p42, %p43
      %p45 = scmp.ne.s32.totalorder %s34, %s37
      %p46 = scmp.eq.s32.totalorder %s17, 3
      %p47 = por %p45, %p46
      %p48 = scmp.ne.s32.totalorder %s37, %s38
      %p49 = scmp.eq.s32.totalorder %s17, 0
      %p50 = por %p48, %p49
      %p51 = scmp.ne.s32.totalorder %s37, %s38
      %p52 = scmp.eq.s32.totalorder %s18, 3
      %p53 = por %p51, %p52
      %p55 = scmp.ne.s32.totalorder %s38, %s54
      %p56 = scmp.eq.s32.totalorder %s18, 0
      %p57 = por %p55, %p56
      %s59 = sadd.s32 %s58, 1
      %p62 = scmp.eq.s32.totalorder %s12, 3
      %p63 = scmp.ne.s32.totalorder %s58, %s60
      %p64 = scmp.eq.s32.totalorder %s12, 0
      %p65 = por %p63, %p64
      %p66 = scmp.ne.s32.totalorder %s58, %s60
      %p67 = scmp.eq.s32.totalorder %s17, 3
      %p68 = por %p66, %p67
      %p69 = scmp.ne.s32.totalorder %s60, %s61
      %p70 = scmp.eq.s32.totalorder %s17, 0
      %p71 = por %p69, %p70
      %p72 = scmp.ne.s32.totalorder %s60, %s61
      %p73 = scmp.eq.s32.totalorder %s18, 3
      %p74 = por %p72, %p73
      %p76 = scmp.ne.s32.totalorder %s61, %s75
      %p77 = scmp.eq.s32.totalorder %s18, 0
      %p78 = por %p76, %p77
      %s80 = sadd.s32 %s79, 1
      %p83 = scmp.eq.s32.totalorder %s12, 3
      %p84 = scmp.ne.s32.totalorder %s79, %s81
      %p85 = scmp.eq.s32.totalorder %s12, 0
      %p86 = por %p84, %p85
      %p87 = scmp.ne.s32.totalorder %s79, %s81
      %p88 = scmp.eq.s32.totalorder %s17, 3
      %p89 = por %p87, %p88
      %p90 = scmp.ne.s32.totalorder %s81, %s82
      %p91 = scmp.eq.s32.totalorder %s17, 0
      %p92 = por %p90, %p91
      %p93 = scmp.ne.s32.totalorder %s81, %s82
      %p94 = scmp.eq.s32.totalorder %s18, 3
      %p95 = por %p93, %p94
      %p97 = scmp.ne.s32.totalorder %s82, %s96
      %p98 = scmp.eq.s32.totalorder %s18, 0
      %p99 = por %p97, %p98
      %s100 = ssub.s32 %s19, %s31
      %s101 = ssub.s32 %s20, %s27
      %s102 = sor.u32 %s100, %s101
      %p103 = scmp.eq.s32.totalorder %s102, 0
      %s105 = sadd.s32 %s104, 1
      %s106 = scalar_select %p103, %s104, %s105
      %p109 = pneg %p103
      %p110 = scmp.eq.s32.totalorder %s12, 3
      %p111 = por %p109, %p110
      %p112 = scmp.ne.s32.totalorder %s104, %s107
      %p113 = scmp.eq.s32.totalorder %s12, 0
      %p114 = por %p112, %p113
      %p115 = scmp.ne.s32.totalorder %s104, %s107
      %p116 = scmp.eq.s32.totalorder %s17, 3
      %p117 = por %p115, %p116
      %p118 = scmp.ne.s32.totalorder %s107, %s108
      %p119 = scmp.eq.s32.totalorder %s17, 0
      %p120 = por %p118, %p119
      %p121 = scmp.ne.s32.totalorder %s107, %s108
      %p122 = scmp.eq.s32.totalorder %s18, 3
      %p123 = por %p121, %p122
      %p125 = scmp.ne.s32.totalorder %s108, %s124
      %p126 = scmp.eq.s32.totalorder %s18, 0
      %p127 = por %p125, %p126
      %p128 = scmp.le.s32.totalorder 1, %s12
      %p129 = scmp.lt.s32.totalorder %s12, 5
      %p130 = pnand %p128, %p129
      %p131 = pneg %p130
      // Predicated region
      $region9: #{tpu_custom_call.1} parent=5 // pred_check
        _
      $region10: #{tpu_custom_call.1} parent=5 // pred_check_branch
        %133 = sbr.rel (%p130) target = $region12
      $region11: #{tpu_custom_call.1} parent=5 // pred_region
        %s134 = ssub.s32 %s12, 1
        // Predicated region
        $region13: #{tpu_custom_call.1} parent=11 // pred_check
          %p135 = pneg %p71
        $region14: #{tpu_custom_call.1} parent=11 // pred_check_branch
          %137 = sbr.rel (%p135) target = $region16
        $region15: #{tpu_custom_call.1} parent=11 // pred_region
          _
        $region16: #{tpu_custom_call.1} parent=11 // pred_fallthru
          _
        // Predicated region
        $region17: #{tpu_custom_call.1} parent=11 // pred_check
          %p138 = pneg %p92
        $region18: #{tpu_custom_call.1} parent=11 // pred_check_branch
          %140 = sbr.rel (%p138) target = $region20
        $region19: #{tpu_custom_call.1} parent=11 // pred_region
          _
        $region20: #{tpu_custom_call.1} parent=11 // pred_fallthru
          _
      $region12: #{tpu_custom_call.1} parent=5 // pred_fallthru
        _
      %p141 = scmp.lt.s32.totalorder %s12, 4
      // Predicated region
      $region21: #{tpu_custom_call.1} parent=5 // pred_check
        %p142 = pneg %p141
      $region22: #{tpu_custom_call.1} parent=5 // pred_check_branch
        %144 = sbr.rel (%p142) target = $region24
      $region23: #{tpu_custom_call.1} parent=5 // pred_region
        // Predicated region
        $region25: #{tpu_custom_call.1} parent=23 // pred_check
          %p145 = pneg %p44
        $region26: #{tpu_custom_call.1} parent=23 // pred_check_branch
          %147 = sbr.rel (%p145) target = $region28
        $region27: #{tpu_custom_call.1} parent=23 // pred_region
          %p148 = scmp.lt.s32.totalorder %s19, 1
          %s149 = scalar_select %p148, %s19, 1
          %s150 = smul.addr %s149, 54
          %s151 = smul.addr %s150, 4
          %s152 = scalar_lea.vmem %s0, %s151
        $region28: #{tpu_custom_call.1} parent=23 // pred_fallthru
          _
      $region24: #{tpu_custom_call.1} parent=5 // pred_fallthru
        _
      %p153 = scmp.le.s32.totalorder 1, %s12
      %p154 = scmp.lt.s32.totalorder %s12, 5
      %p155 = pnand %p153, %p154
      %p156 = pneg %p155
      // Predicated region
      $region29: #{tpu_custom_call.1} parent=5 // pred_check
        _
      $region30: #{tpu_custom_call.1} parent=5 // pred_check_branch
        %158 = sbr.rel (%p155) target = $region32
      $region31: #{tpu_custom_call.1} parent=5 // pred_region
        %s159 = ssub.s32 %s12, 1
        %p160 = scmp.lt.s32.totalorder %s21, 1
        %s161 = scalar_select %p160, %s21, 1
        %s162 = smul.addr %s161, 54
        %s163 = smul.addr %s162, 4
        %s164 = scalar_lea.vmem %s0, %s163
        %p165 = pneg %p50
        %p166 = pneg %p47
        %p167 = pneg %p71
        %p168 = pneg %p68
        %p169 = pneg %p92
        %p170 = pneg %p89
        %p171 = pneg %p120
        %p172 = pneg %p117
        %s173 = sand.u32 %s107, 1
        %s174 = scalar_lea.sflag [#allocation3], %s173
        %s175 = sand.u32 %s107, 1
        %s176 = smul.addr %s175, 128
        %s177 = scalar_lea.vmem [#allocation2], %s176
        %p178 = scmp.lt.s32.totalorder %s21, 1
        %s179 = scalar_select %p178, %s21, 1
        %s180 = smul.addr %s179, 54
        %s181 = smul.addr %s180, 4
        %s182 = scalar_lea.vmem %s0, %s181
        %s183 = smul.u32 16, %s22
        %s185 = smul.u32 %s22, 8
        %s186 = smul.u32 %s185, 3
        %s187 = smul.addr %s186, 4
        %s188 = scalar_lea.vmem %s182, %s187
        %v189 = vld [vmem:[%s188] sm:$0xf]
        %v190 = vld [vmem:[%s188 + $0x4] sm:$0xf]
        %v191 = vld [vmem:[%s188 + $0xc] sm:$0xf]
        %v192 = vld [vmem:[%s188 + $0x10] sm:$0xf]
        %v193 = vld [vmem:[%s188 + $0x18] sm:$0xf]
        %v194 = vld [vmem:[%s188 + $0x1c] sm:$0xf]
        %v195 = vld [vmem:[%s188 + $0x24] sm:$0xf]
        %v196 = vld [vmem:[%s188 + $0x28] sm:$0xf]
        %v197 = vld [vmem:[%s188 + $0x30] sm:$0xf]
        %v198 = vld [vmem:[%s188 + $0x34] sm:$0xf]
        %v199 = vld [vmem:[%s188 + $0x3c] sm:$0xf]
        %v200 = vld [vmem:[%s188 + $0x40] sm:$0xf]
        %v201 = vld [vmem:[%s188 + $0x48] sm:$0xf]
        %v202 = vld [vmem:[%s188 + $0x4c] sm:$0xf]
        %v203 = vld [vmem:[%s188 + $0x54] sm:$0xf]
        %v204 = vld [vmem:[%s188 + $0x58] sm:$0xf]
        %v205 = vld [vmem:[%s1] sm:$0xf]
        %v206 = vld [vmem:[%s1 + $0x4] sm:$0xf]
        %v207 = vld [vmem:[%s188 + $0x8] sm:$0x1]
        %v208 = vld [vmem:[%s188 + $0x14] sm:$0x1]
        %v209 = vld [vmem:[%s188 + $0x20] sm:$0x1]
        %v210 = vld [vmem:[%s188 + $0x2c] sm:$0x1]
        %v211 = vld [vmem:[%s188 + $0x38] sm:$0x1]
        %v212 = vld [vmem:[%s188 + $0x44] sm:$0x1]
        %v213 = vld [vmem:[%s188 + $0x50] sm:$0x1]
        %v214 = vld [vmem:[%s188 + $0x5c] sm:$0x1]
        %vm215 = vsmask.f32 3328
        %vm216 = vsmask.f32 7440
        %vm217 = vmor %vm215, %vm216
        %v219 = vshrl.u32 %v189, 16
        %v221 = vrot.slane %v219, 4
        %v222 = vshll.u32 %v189, 16
        %v224 = vrot.slane %v222, 5
        %v225 = vor.u32 %v221, %v224
        %v226 = vrot.slane %v225, 4
        %v228 = vshll.u32 %v190, 16
        %v230 = vrot.slane %v228, 5
        %v231 = vsel %vm217, %v226, %v230
        %v232 = vshrl.u32 %v190, 16
        %v234 = vrot.slane %v232, 4
        %v235 = vor.u32 %v234, %v230
        %v236 = vrot.slane %v235, 4
        %v238 = vshll.u32 %v207, 16
        %v240 = vrot.slane %v238, 5
        %v241 = vsel %vm217, %v236, %v240
        %v243 = vshrl.u32 %v191, 16
        %v245 = vrot.slane %v243, 4
        %v246 = vshll.u32 %v191, 16
        %v248 = vrot.slane %v246, 5
        %v249 = vor.u32 %v245, %v248
        %v250 = vrot.slane %v249, 4
        %v252 = vshll.u32 %v192, 16
        %v254 = vrot.slane %v252, 5
        %v255 = vsel %vm217, %v250, %v254
        %v256 = vshrl.u32 %v192, 16
        %v258 = vrot.slane %v256, 4
        %v259 = vor.u32 %v258, %v254
        %v260 = vrot.slane %v259, 4
        %v262 = vshll.u32 %v208, 16
        %v264 = vrot.slane %v262, 5
        %v265 = vsel %vm217, %v260, %v264
        %v267 = vshrl.u32 %v193, 16
        %v269 = vrot.slane %v267, 4
        %v270 = vshll.u32 %v193, 16
        %v272 = vrot.slane %v270, 5
        %v273 = vor.u32 %v269, %v272
        %v274 = vrot.slane %v273, 4
        %v276 = vshll.u32 %v194, 16
        %v278 = vrot.slane %v276, 5
        %v279 = vsel %vm217, %v274, %v278
        %v280 = vshrl.u32 %v194, 16
        %v282 = vrot.slane %v280, 4
        %v283 = vor.u32 %v282, %v278
        %v284 = vrot.slane %v283, 4
        %v286 = vshll.u32 %v209, 16
        %v288 = vrot.slane %v286, 5
        %v289 = vsel %vm217, %v284, %v288
        %v291 = vshrl.u32 %v195, 16
        %v293 = vrot.slane %v291, 4
        %v294 = vshll.u32 %v195, 16
        %v296 = vrot.slane %v294, 5
        %v297 = vor.u32 %v293, %v296
        %v298 = vrot.slane %v297, 4
        %v300 = vshll.u32 %v196, 16
        %v302 = vrot.slane %v300, 5
        %v303 = vsel %vm217, %v298, %v302
        %v304 = vshrl.u32 %v196, 16
        %v306 = vrot.slane %v304, 4
        %v307 = vor.u32 %v306, %v302
        %v308 = vrot.slane %v307, 4
        %v310 = vshll.u32 %v210, 16
        %v312 = vrot.slane %v310, 5
        %v313 = vsel %vm217, %v308, %v312
        %v315 = vshrl.u32 %v197, 16
        %v317 = vrot.slane %v315, 4
        %v318 = vshll.u32 %v197, 16
        %v320 = vrot.slane %v318, 5
        %v321 = vor.u32 %v317, %v320
        %v322 = vrot.slane %v321, 4
        %v324 = vshll.u32 %v198, 16
        %v326 = vrot.slane %v324, 5
        %v327 = vsel %vm217, %v322, %v326
        %v328 = vshrl.u32 %v198, 16
        %v330 = vrot.slane %v328, 4
        %v331 = vor.u32 %v330, %v326
        %v332 = vrot.slane %v331, 4
        %v334 = vshll.u32 %v211, 16
        %v336 = vrot.slane %v334, 5
        %v337 = vsel %vm217, %v332, %v336
        %v339 = vshrl.u32 %v199, 16
        %v341 = vrot.slane %v339, 4
        %v342 = vshll.u32 %v199, 16
        %v344 = vrot.slane %v342, 5
        %v345 = vor.u32 %v341, %v344
        %v346 = vrot.slane %v345, 4
        %v348 = vshll.u32 %v200, 16
        %v350 = vrot.slane %v348, 5
        %v351 = vsel %vm217, %v346, %v350
        %v352 = vshrl.u32 %v200, 16
        %v354 = vrot.slane %v352, 4
        %v355 = vor.u32 %v354, %v350
        %v356 = vrot.slane %v355, 4
        %v358 = vshll.u32 %v212, 16
        %v360 = vrot.slane %v358, 5
        %v361 = vsel %vm217, %v356, %v360
        %v363 = vshrl.u32 %v201, 16
        %v365 = vrot.slane %v363, 4
        %v366 = vshll.u32 %v201, 16
        %v368 = vrot.slane %v366, 5
        %v369 = vor.u32 %v365, %v368
        %v370 = vrot.slane %v369, 4
        %v372 = vshll.u32 %v202, 16
        %v374 = vrot.slane %v372, 5
        %v375 = vsel %vm217, %v370, %v374
        %v376 = vshrl.u32 %v202, 16
        %v378 = vrot.slane %v376, 4
        %v379 = vor.u32 %v378, %v374
        %v380 = vrot.slane %v379, 4
        %v382 = vshll.u32 %v213, 16
        %v384 = vrot.slane %v382, 5
        %v385 = vsel %vm217, %v380, %v384
        %v387 = vshrl.u32 %v203, 16
        %v389 = vrot.slane %v387, 4
        %v390 = vshll.u32 %v203, 16
        %v392 = vrot.slane %v390, 5
        %v393 = vor.u32 %v389, %v392
        %v394 = vrot.slane %v393, 4
        %v396 = vshll.u32 %v204, 16
        %v398 = vrot.slane %v396, 5
        %v399 = vsel %vm217, %v394, %v398
        %v400 = vshrl.u32 %v204, 16
        %v402 = vrot.slane %v400, 4
        %v403 = vor.u32 %v402, %v398
        %v404 = vrot.slane %v403, 4
        %v406 = vshll.u32 %v214, 16
        %v408 = vrot.slane %v406, 5
        %v409 = vsel %vm217, %v404, %v408
        %s410 = scalar_lea.vmem %s1, 8
        %v411 = vld [vmem:[%s410] sm:$0xf]
        %v412 = vld [vmem:[%s410 + $0x4] sm:$0xf]
        %v413 = vunpack.c.l.b16 %v231
        %v414 = vunpack.c.l.b16 %v241
        %v415 = vunpack.c.l.b16 %v255
        %v416 = vunpack.c.l.b16 %v265
        %v417 = vunpack.c.l.b16 %v279
        %v418 = vunpack.c.l.b16 %v289
        %v419 = vunpack.c.l.b16 %v303
        %v420 = vunpack.c.l.b16 %v313
        %v421 = vunpack.c.l.b16 %v327
        %v422 = vunpack.c.l.b16 %v337
        %v423 = vunpack.c.l.b16 %v351
        %v424 = vunpack.c.l.b16 %v361
        %v425 = vunpack.c.l.b16 %v375
        %v426 = vunpack.c.l.b16 %v385
        %v427 = vunpack.c.l.b16 %v399
        %v428 = vunpack.c.l.b16 %v409
        %v429 = vpack.c.b16 %v414, %v413
        %v430 = vpack.c.b16 %v416, %v415
        %v431 = vpack.c.b16 %v418, %v417
        %v432 = vpack.c.b16 %v420, %v419
        %v433 = vpack.c.b16 %v422, %v421
        %v434 = vpack.c.b16 %v424, %v423
        %v435 = vpack.c.b16 %v426, %v425
        %v436 = vpack.c.b16 %v428, %v427
        %v439 = vunpack.c.l.b16 %v411
        %v440 = vunpack.c.l.b16 %v412
        %v441 = vpack.c.b16 %v440, %v439
        %vm443 = vcmask 130048
        %v445 = vsel %vm443, %v429, 0
        %v448 = vsel %vm443, %v430, 0
        %v451 = vsel %vm443, %v431, 0
        %v454 = vsel %vm443, %v432, 0
        %v457 = vsel %vm443, %v433, 0
        %v460 = vsel %vm443, %v434, 0
        %v463 = vsel %vm443, %v435, 0
        %v466 = vsel %vm443, %v436, 0
        %468 = vmatprep.subr.bf16.mxu0 0
        %469 = vmatpush1.bf16.msra.mxu0 %v441
        %470 = vmatprep.subr.bf16.mxu0 0
        %471 = vmatpush1.bf16.msra.mxu0 0
        %472 = vmatprep.subr.bf16.mxu0 0
        %473 = vmatpush1.bf16.msra.mxu0 0
        %474 = vmatprep.subr.bf16.mxu0 0
        %475 = vmatpush1.bf16.msra.mxu0 0
        %476 = vmatprep.subr.bf16.mxu0 0
        %477 = vmatpush1.bf16.msra.mxu0 0
        %478 = vmatprep.subr.bf16.mxu0 0
        %479 = vmatpush1.bf16.msra.mxu0 0
        %480 = vmatprep.subr.bf16.mxu0 0
        %481 = vmatpush1.bf16.msra.mxu0 0
        %482 = vmatprep.subr.bf16.mxu0 0
        %483 = vmatpush1.bf16.msra.mxu0 0
        %484 = vmatprep.subr.bf16.mxu0 0
        %485 = vmatpush1.bf16.msra.mxu0 0
        %486 = vmatprep.subr.bf16.mxu0 0
        %487 = vmatpush1.bf16.msra.mxu0 0
        %488 = vmatprep.subr.bf16.mxu0 0
        %489 = vmatpush1.bf16.msra.mxu0 0
        %490 = vmatprep.subr.bf16.mxu0 0
        %491 = vmatpush1.bf16.msra.mxu0 0
        %492 = vmatprep.subr.bf16.mxu0 0
        %493 = vmatpush1.bf16.msra.mxu0 0
        %494 = vmatprep.subr.bf16.mxu0 0
        %495 = vmatpush1.bf16.msra.mxu0 0
        %496 = vmatprep.subr.bf16.mxu0 0
        %497 = vmatpush1.bf16.msra.mxu0 0
        %498 = vmatprep.subr.bf16.mxu0 0
        %499 = vmatpush1.bf16.msra.mxu0 0
        %500 = vmatprep.mubr.bf16.mxu0 0
        %501 = vmatmul.mubr.bf16.gmra.mrb[0].mxu0 %v445
        %v502 = vpop.f32.mrb[0].mxu0
        %v503 = vadd.f32 0.0, %v502
        %v504 = vpop.f32.mrb[0].mxu0
        %v505 = vpop.f32.mrb[0].mxu0
        %v506 = vadd.f32 0.0, %v505
        %v507 = vpop.f32.mrb[0].mxu0
        %508 = vmatprep.mubr.bf16.mxu0 0
        %509 = vmatmul.mubr.bf16.gmra.mrb[0].mxu0 %v448
        %v510 = vpop.f32.mrb[0].mxu0
        %v511 = vadd.f32 0.0, %v510
        %v512 = vpop.f32.mrb[0].mxu0
        %v513 = vpop.f32.mrb[0].mxu0
        %v514 = vadd.f32 0.0, %v513
        %v515 = vpop.f32.mrb[0].mxu0
        %516 = vmatprep.mubr.bf16.mxu0 0
        %517 = vmatmul.mubr.bf16.gmra.mrb[0].mxu0 %v451
        %v518 = vpop.f32.mrb[0].mxu0
        %v519 = vadd.f32 0.0, %v518
        %v520 = vpop.f32.mrb[0].mxu0
        %v521 = vpop.f32.mrb[0].mxu0
        %v522 = vadd.f32 0.0, %v521
        %v523 = vpop.f32.mrb[0].mxu0
        %524 = vmatprep.mubr.bf16.mxu0 0
        %525 = vmatmul.mubr.bf16.gmra.mrb[0].mxu0 %v454
        %v526 = vpop.f32.mrb[0].mxu0
        %v527 = vadd.f32 0.0, %v526
        %v528 = vpop.f32.mrb[0].mxu0
        %v529 = vpop.f32.mrb[0].mxu0
        %v530 = vadd.f32 0.0, %v529
        %v531 = vpop.f32.mrb[0].mxu0
        %532 = vmatprep.mubr.bf16.mxu0 0
        %533 = vmatmul.mubr.bf16.gmra.mrb[0].mxu0 %v457
        %v534 = vpop.f32.mrb[0].mxu0
        %v535 = vadd.f32 0.0, %v534
        %v536 = vpop.f32.mrb[0].mxu0
        %v537 = vpop.f32.mrb[0].mxu0
        %v538 = vadd.f32 0.0, %v537
        %v539 = vpop.f32.mrb[0].mxu0
        %540 = vmatprep.mubr.bf16.mxu0 0
        %541 = vmatmul.mubr.bf16.gmra.mrb[0].mxu0 %v460
        %v542 = vpop.f32.mrb[0].mxu0
        %v543 = vadd.f32 0.0, %v542
        %v544 = vpop.f32.mrb[0].mxu0
        %v545 = vpop.f32.mrb[0].mxu0
        %v546 = vadd.f32 0.0, %v545
        %v547 = vpop.f32.mrb[0].mxu0
        %548 = vmatprep.mubr.bf16.mxu0 0
        %549 = vmatmul.mubr.bf16.gmra.mrb[0].mxu0 %v463
        %v550 = vpop.f32.mrb[0].mxu0
        %v551 = vadd.f32 0.0, %v550
        %v552 = vpop.f32.mrb[0].mxu0
        %v553 = vpop.f32.mrb[0].mxu0
        %v554 = vadd.f32 0.0, %v553
        %v555 = vpop.f32.mrb[0].mxu0
        %556 = vmatprep.mubr.bf16.mxu0 0
        %557 = vmatmul.mubr.bf16.gmra.mrb[0].mxu0 %v466
        %v558 = vpop.f32.mrb[0].mxu0
        %v559 = vadd.f32 0.0, %v558
        %v560 = vpop.f32.mrb[0].mxu0
        %v561 = vpop.f32.mrb[0].mxu0
        %v562 = vadd.f32 0.0, %v561
        %v563 = vpop.f32.mrb[0].mxu0
        %564 = vdwg.mxu0
        %v581 = vunpack.c.l.b16 %v189
        %v582 = vunpack.c.l.b16 %v190
        %v583 = vunpack.c.l.b16 %v191
        %v584 = vunpack.c.l.b16 %v192
        %v585 = vunpack.c.l.b16 %v193
        %v586 = vunpack.c.l.b16 %v194
        %v587 = vunpack.c.l.b16 %v195
        %v588 = vunpack.c.l.b16 %v196
        %v589 = vunpack.c.l.b16 %v197
        %v590 = vunpack.c.l.b16 %v198
        %v591 = vunpack.c.l.b16 %v199
        %v592 = vunpack.c.l.b16 %v200
        %v593 = vunpack.c.l.b16 %v201
        %v594 = vunpack.c.l.b16 %v202
        %v595 = vunpack.c.l.b16 %v203
        %v596 = vunpack.c.l.b16 %v204
        %v597 = vpack.c.b16 %v582, %v581
        %v598 = vpack.c.b16 %v584, %v583
        %v599 = vpack.c.b16 %v586, %v585
        %v600 = vpack.c.b16 %v588, %v587
        %v601 = vpack.c.b16 %v590, %v589
        %v602 = vpack.c.b16 %v592, %v591
        %v603 = vpack.c.b16 %v594, %v593
        %v604 = vpack.c.b16 %v596, %v595
        %v607 = vunpack.c.l.b16 %v205
        %v608 = vunpack.c.l.b16 %v206
        %v609 = vpack.c.b16 %v608, %v607
        %v612 = vsel %vm443, %v597, 0
        %v615 = vsel %vm443, %v598, 0
        %v618 = vsel %vm443, %v599, 0
        %v621 = vsel %vm443, %v600, 0
        %v624 = vsel %vm443, %v601, 0
        %v627 = vsel %vm443, %v602, 0
        %v630 = vsel %vm443, %v603, 0
        %v633 = vsel %vm443, %v604, 0
        %635 = vmatprep.subr.bf16.mxu0 0
        %636 = vmatpush1.bf16.msra.mxu0 %v609
        %637 = vmatprep.subr.bf16.mxu0 0
        %638 = vmatpush1.bf16.msra.mxu0 0
        %639 = vmatprep.subr.bf16.mxu0 0
        %640 = vmatpush1.bf16.msra.mxu0 0
        %641 = vmatprep.subr.bf16.mxu0 0
        %642 = vmatpush1.bf16.msra.mxu0 0
        %643 = vmatprep.subr.bf16.mxu0 0
        %644 = vmatpush1.bf16.msra.mxu0 0
        %645 = vmatprep.subr.bf16.mxu0 0
        %646 = vmatpush1.bf16.msra.mxu0 0
        %647 = vmatprep.subr.bf16.mxu0 0
        %648 = vmatpush1.bf16.msra.mxu0 0
        %649 = vmatprep.subr.bf16.mxu0 0
        %650 = vmatpush1.bf16.msra.mxu0 0
        %651 = vmatprep.subr.bf16.mxu0 0
        %652 = vmatpush1.bf16.msra.mxu0 0
        %653 = vmatprep.subr.bf16.mxu0 0
        %654 = vmatpush1.bf16.msra.mxu0 0
        %655 = vmatprep.subr.bf16.mxu0 0
        %656 = vmatpush1.bf16.msra.mxu0 0
        %657 = vmatprep.subr.bf16.mxu0 0
        %658 = vmatpush1.bf16.msra.mxu0 0
        %659 = vmatprep.subr.bf16.mxu0 0
        %660 = vmatpush1.bf16.msra.mxu0 0
        %661 = vmatprep.subr.bf16.mxu0 0
        %662 = vmatpush1.bf16.msra.mxu0 0
        %663 = vmatprep.subr.bf16.mxu0 0
        %664 = vmatpush1.bf16.msra.mxu0 0
        %665 = vmatprep.subr.bf16.mxu0 0
        %666 = vmatpush1.bf16.msra.mxu0 0
        %667 = vmatprep.mubr.bf16.mxu0 0
        %668 = vmatmul.mubr.bf16.gmra.mrb[0].mxu0 %v612
        %v669 = vpop.f32.mrb[0].mxu0
        %v670 = vadd.f32 %v503, %v669
        %v671 = vpop.f32.mrb[0].mxu0
        %v672 = vpop.f32.mrb[0].mxu0
        %v673 = vadd.f32 %v506, %v672
        %v674 = vpop.f32.mrb[0].mxu0
        %675 = vmatprep.mubr.bf16.mxu0 0
        %676 = vmatmul.mubr.bf16.gmra.mrb[0].mxu0 %v615
        %v677 = vpop.f32.mrb[0].mxu0
        %v678 = vadd.f32 %v511, %v677
        %v679 = vpop.f32.mrb[0].mxu0
        %v680 = vpop.f32.mrb[0].mxu0
        %v681 = vadd.f32 %v514, %v680
        %v682 = vpop.f32.mrb[0].mxu0
        %683 = vmatprep.mubr.bf16.mxu0 0
        %684 = vmatmul.mubr.bf16.gmra.mrb[0].mxu0 %v618
        %v685 = vpop.f32.mrb[0].mxu0
        %v686 = vadd.f32 %v519, %v685
        %v687 = vpop.f32.mrb[0].mxu0
        %v688 = vpop.f32.mrb[0].mxu0
        %v689 = vadd.f32 %v522, %v688
        %v690 = vpop.f32.mrb[0].mxu0
        %691 = vmatprep.mubr.bf16.mxu0 0
        %692 = vmatmul.mubr.bf16.gmra.mrb[0].mxu0 %v621
        %v693 = vpop.f32.mrb[0].mxu0
        %v694 = vadd.f32 %v527, %v693
        %v695 = vpop.f32.mrb[0].mxu0
        %v696 = vpop.f32.mrb[0].mxu0
        %v697 = vadd.f32 %v530, %v696
        %v698 = vpop.f32.mrb[0].mxu0
        %699 = vmatprep.mubr.bf16.mxu0 0
        %700 = vmatmul.mubr.bf16.gmra.mrb[0].mxu0 %v624
        %v701 = vpop.f32.mrb[0].mxu0
        %v702 = vadd.f32 %v535, %v701
        %v703 = vpop.f32.mrb[0].mxu0
        %v704 = vpop.f32.mrb[0].mxu0
        %v705 = vadd.f32 %v538, %v704
        %v706 = vpop.f32.mrb[0].mxu0
        %707 = vmatprep.mubr.bf16.mxu0 0
        %708 = vmatmul.mubr.bf16.gmra.mrb[0].mxu0 %v627
        %v709 = vpop.f32.mrb[0].mxu0
        %v710 = vadd.f32 %v543, %v709
        %v711 = vpop.f32.mrb[0].mxu0
        %v712 = vpop.f32.mrb[0].mxu0
        %v713 = vadd.f32 %v546, %v712
        %v714 = vpop.f32.mrb[0].mxu0
        %715 = vmatprep.mubr.bf16.mxu0 0
        %716 = vmatmul.mubr.bf16.gmra.mrb[0].mxu0 %v630
        %v717 = vpop.f32.mrb[0].mxu0
        %v718 = vadd.f32 %v551, %v717
        %v719 = vpop.f32.mrb[0].mxu0
        %v720 = vpop.f32.mrb[0].mxu0
        %v721 = vadd.f32 %v554, %v720
        %v722 = vpop.f32.mrb[0].mxu0
        %723 = vmatprep.mubr.bf16.mxu0 0
        %724 = vmatmul.mubr.bf16.gmra.mrb[0].mxu0 %v633
        %v725 = vpop.f32.mrb[0].mxu0
        %v726 = vadd.f32 %v559, %v725
        %v727 = vpop.f32.mrb[0].mxu0
        %v728 = vpop.f32.mrb[0].mxu0
        %v729 = vadd.f32 %v562, %v728
        %v730 = vpop.f32.mrb[0].mxu0
        %731 = vdwg.mxu0
        %v732 = vld [vmem:[%s188] sm:$0xe]
        %v733 = vld [vmem:[%s188 + $0xc] sm:$0xe]
        %v734 = vld [vmem:[%s188 + $0x18] sm:$0xe]
        %v735 = vld [vmem:[%s188 + $0x24] sm:$0xe]
        %v736 = vld [vmem:[%s188 + $0x30] sm:$0xe]
        %v737 = vld [vmem:[%s188 + $0x3c] sm:$0xe]
        %v738 = vld [vmem:[%s188 + $0x48] sm:$0xe]
        %v739 = vld [vmem:[%s188 + $0x54] sm:$0xe]
        %vm756 = vcmask 1042432
        %vm757 = vcmask 1046532
        %vm758 = vmor %vm756, %vm757
        %v759 = vrot.slane %v732, 5
        %v760 = vrot.slane %v759, 4
        %v761 = vrot.slane %v190, 5
        %v762 = vsel %vm758, %v760, %v761
        %v763 = vrot.slane %v761, 4
        %v764 = vrot.slane %v207, 5
        %v765 = vsel %vm758, %v763, %v764
        %v766 = vrot.slane %v733, 5
        %v767 = vrot.slane %v766, 4
        %v768 = vrot.slane %v192, 5
        %v769 = vsel %vm758, %v767, %v768
        %v770 = vrot.slane %v768, 4
        %v771 = vrot.slane %v208, 5
        %v772 = vsel %vm758, %v770, %v771
        %v773 = vrot.slane %v734, 5
        %v774 = vrot.slane %v773, 4
        %v775 = vrot.slane %v194, 5
        %v776 = vsel %vm758, %v774, %v775
        %v777 = vrot.slane %v775, 4
        %v778 = vrot.slane %v209, 5
        %v779 = vsel %vm758, %v777, %v778
        %v780 = vrot.slane %v735, 5
        %v781 = vrot.slane %v780, 4
        %v782 = vrot.slane %v196, 5
        %v783 = vsel %vm758, %v781, %v782
        %v784 = vrot.slane %v782, 4
        %v785 = vrot.slane %v210, 5
        %v786 = vsel %vm758, %v784, %v785
        %v787 = vrot.slane %v736, 5
        %v788 = vrot.slane %v787, 4
        %v789 = vrot.slane %v198, 5
        %v790 = vsel %vm758, %v788, %v789
        %v791 = vrot.slane %v789, 4
        %v792 = vrot.slane %v211, 5
        %v793 = vsel %vm758, %v791, %v792
        %v794 = vrot.slane %v737, 5
        %v795 = vrot.slane %v794, 4
        %v796 = vrot.slane %v200, 5
        %v797 = vsel %vm758, %v795, %v796
        %v798 = vrot.slane %v796, 4
        %v799 = vrot.slane %v212, 5
        %v800 = vsel %vm758, %v798, %v799
        %v801 = vrot.slane %v738, 5
        %v802 = vrot.slane %v801, 4
        %v803 = vrot.slane %v202, 5
        %v804 = vsel %vm758, %v802, %v803
        %v805 = vrot.slane %v803, 4
        %v806 = vrot.slane %v213, 5
        %v807 = vsel %vm758, %v805, %v806
        %v808 = vrot.slane %v739, 5
        %v809 = vrot.slane %v808, 4
        %v810 = vrot.slane %v204, 5
        %v811 = vsel %vm758, %v809, %v810
        %v812 = vrot.slane %v810, 4
        %v813 = vrot.slane %v214, 5
        %v814 = vsel %vm758, %v812, %v813
        %s815 = scalar_lea.vmem %s1, 16
        %v816 = vld [vmem:[%s815] sm:$0xf]
        %v817 = vld [vmem:[%s815 + $0x4] sm:$0xf]
        %v818 = vunpack.c.l.b16 %v762
        %v819 = vunpack.c.l.b16 %v765
        %v820 = vunpack.c.l.b16 %v769
        %v821 = vunpack.c.l.b16 %v772
        %v822 = vunpack.c.l.b16 %v776
        %v823 = vunpack.c.l.b16 %v779
        %v824 = vunpack.c.l.b16 %v783
        %v825 = vunpack.c.l.b16 %v786
        %v826 = vunpack.c.l.b16 %v790
        %v827 = vunpack.c.l.b16 %v793
        %v828 = vunpack.c.l.b16 %v797
        %v829 = vunpack.c.l.b16 %v800
        %v830 = vunpack.c.l.b16 %v804
        %v831 = vunpack.c.l.b16 %v807
        %v832 = vunpack.c.l.b16 %v811
        %v833 = vunpack.c.l.b16 %v814
        %v834 = vpack.c.b16 %v819, %v818
        %v835 = vpack.c.b16 %v821, %v820
        %v836 = vpack.c.b16 %v823, %v822
        %v837 = vpack.c.b16 %v825, %v824
        %v838 = vpack.c.b16 %v827, %v826
        %v839 = vpack.c.b16 %v829, %v828
        %v840 = vpack.c.b16 %v831, %v830
        %v841 = vpack.c.b16 %v833, %v832
        %v844 = vunpack.c.l.b16 %v816
        %v845 = vunpack.c.l.b16 %v817
        %v846 = vpack.c.b16 %v845, %v844
        %v849 = vsel %vm443, %v834, 0
        %v852 = vsel %vm443, %v835, 0
        %v855 = vsel %vm443, %v836, 0
        %v858 = vsel %vm443, %v837, 0
        %v861 = vsel %vm443, %v838, 0
        %v864 = vsel %vm443, %v839, 0
        %v867 = vsel %vm443, %v840, 0
        %v870 = vsel %vm443, %v841, 0
        %872 = vmatprep.subr.bf16.mxu0 0
        %873 = vmatpush1.bf16.msra.mxu0 %v846
        %874 = vmatprep.subr.bf16.mxu0 0
        %875 = vmatpush1.bf16.msra.mxu0 0
        %876 = vmatprep.subr.bf16.mxu0 0
        %877 = vmatpush1.bf16.msra.mxu0 0
        %878 = vmatprep.subr.bf16.mxu0 0
        %879 = vmatpush1.bf16.msra.mxu0 0
        %880 = vmatprep.subr.bf16.mxu0 0
        %881 = vmatpush1.bf16.msra.mxu0 0
        %882 = vmatprep.subr.bf16.mxu0 0
        %883 = vmatpush1.bf16.msra.mxu0 0
        %884 = vmatprep.subr.bf16.mxu0 0
        %885 = vmatpush1.bf16.msra.mxu0 0
        %886 = vmatprep.subr.bf16.mxu0 0
        %887 = vmatpush1.bf16.msra.mxu0 0
        %888 = vmatprep.subr.bf16.mxu0 0
        %889 = vmatpush1.bf16.msra.mxu0 0
        %890 = vmatprep.subr.bf16.mxu0 0
        %891 = vmatpush1.bf16.msra.mxu0 0
        %892 = vmatprep.subr.bf16.mxu0 0
        %893 = vmatpush1.bf16.msra.mxu0 0
        %894 = vmatprep.subr.bf16.mxu0 0
        %895 = vmatpush1.bf16.msra.mxu0 0
        %896 = vmatprep.subr.bf16.mxu0 0
        %897 = vmatpush1.bf16.msra.mxu0 0
        %898 = vmatprep.subr.bf16.mxu0 0
        %899 = vmatpush1.bf16.msra.mxu0 0
        %900 = vmatprep.subr.bf16.mxu0 0
        %901 = vmatpush1.bf16.msra.mxu0 0
        %902 = vmatprep.subr.bf16.mxu0 0
        %903 = vmatpush1.bf16.msra.mxu0 0
        %904 = vmatprep.mubr.bf16.mxu0 0
        %905 = vmatmul.mubr.bf16.gmra.mrb[0].mxu0 %v849
        %v906 = vpop.f32.mrb[0].mxu0
        %v907 = vadd.f32 0.0, %v906
        %v908 = vpop.f32.mrb[0].mxu0
        %v909 = vpop.f32.mrb[0].mxu0
        %v910 = vadd.f32 0.0, %v909
        %v911 = vpop.f32.mrb[0].mxu0
        %912 = vmatprep.mubr.bf16.mxu0 0
        %913 = vmatmul.mubr.bf16.gmra.mrb[0].mxu0 %v852
        %v914 = vpop.f32.mrb[0].mxu0
        %v915 = vadd.f32 0.0, %v914
        %v916 = vpop.f32.mrb[0].mxu0
        %v917 = vpop.f32.mrb[0].mxu0
        %v918 = vadd.f32 0.0, %v917
        %v919 = vpop.f32.mrb[0].mxu0
        %920 = vmatprep.mubr.bf16.mxu0 0
        %921 = vmatmul.mubr.bf16.gmra.mrb[0].mxu0 %v855
        %v922 = vpop.f32.mrb[0].mxu0
        %v923 = vadd.f32 0.0, %v922
        %v924 = vpop.f32.mrb[0].mxu0
        %v925 = vpop.f32.mrb[0].mxu0
        %v926 = vadd.f32 0.0, %v925
        %v927 = vpop.f32.mrb[0].mxu0
        %928 = vmatprep.mubr.bf16.mxu0 0
        %929 = vmatmul.mubr.bf16.gmra.mrb[0].mxu0 %v858
        %v930 = vpop.f32.mrb[0].mxu0
        %v931 = vadd.f32 0.0, %v930
        %v932 = vpop.f32.mrb[0].mxu0
        %v933 = vpop.f32.mrb[0].mxu0
        %v934 = vadd.f32 0.0, %v933
        %v935 = vpop.f32.mrb[0].mxu0
        %936 = vmatprep.mubr.bf16.mxu0 0
        %937 = vmatmul.mubr.bf16.gmra.mrb[0].mxu0 %v861
        %v938 = vpop.f32.mrb[0].mxu0
        %v939 = vadd.f32 0.0, %v938
        %v940 = vpop.f32.mrb[0].mxu0
        %v941 = vpop.f32.mrb[0].mxu0
        %v942 = vadd.f32 0.0, %v941
        %v943 = vpop.f32.mrb[0].mxu0
        %944 = vmatprep.mubr.bf16.mxu0 0
        %945 = vmatmul.mubr.bf16.gmra.mrb[0].mxu0 %v864
        %v946 = vpop.f32.mrb[0].mxu0
        %v947 = vadd.f32 0.0, %v946
        %v948 = vpop.f32.mrb[0].mxu0
        %v949 = vpop.f32.mrb[0].mxu0
        %v950 = vadd.f32 0.0, %v949
        %v951 = vpop.f32.mrb[0].mxu0
        %952 = vmatprep.mubr.bf16.mxu0 0
        %953 = vmatmul.mubr.bf16.gmra.mrb[0].mxu0 %v867
        %v954 = vpop.f32.mrb[0].mxu0
        %v955 = vadd.f32 0.0, %v954
        %v956 = vpop.f32.mrb[0].mxu0
        %v957 = vpop.f32.mrb[0].mxu0
        %v958 = vadd.f32 0.0, %v957
        %v959 = vpop.f32.mrb[0].mxu0
        %960 = vmatprep.mubr.bf16.mxu0 0
        %961 = vmatmul.mubr.bf16.gmra.mrb[0].mxu0 %v870
        %v962 = vpop.f32.mrb[0].mxu0
        %v963 = vadd.f32 0.0, %v962
        %v964 = vpop.f32.mrb[0].mxu0
        %v965 = vpop.f32.mrb[0].mxu0
        %v966 = vadd.f32 0.0, %v965
        %v967 = vpop.f32.mrb[0].mxu0
        %968 = vdwg.mxu0
        %v969 = vadd.f32 %v670, %v907
        %v970 = vadd.f32 %v673, %v910
        %v971 = vadd.f32 %v678, %v915
        %v972 = vadd.f32 %v681, %v918
        %v973 = vadd.f32 %v686, %v923
        %v974 = vadd.f32 %v689, %v926
        %v975 = vadd.f32 %v694, %v931
        %v976 = vadd.f32 %v697, %v934
        %v977 = vadd.f32 %v702, %v939
        %v978 = vadd.f32 %v705, %v942
        %v979 = vadd.f32 %v710, %v947
        %v980 = vadd.f32 %v713, %v950
        %v981 = vadd.f32 %v718, %v955
        %v982 = vadd.f32 %v721, %v958
        %v983 = vadd.f32 %v726, %v963
        %v984 = vadd.f32 %v729, %v966
        %s985 = sadd.s32 %s185, 1
        %s986 = smul.u32 %s985, 3
        %s987 = smul.addr %s986, 4
        %s988 = scalar_lea.vmem %s182, %s987
        %v989 = vld [vmem:[%s988] sm:$0xf]
        %v990 = vld [vmem:[%s988 + $0x4] sm:$0xf]
        %v991 = vld [vmem:[%s988 + $0xc] sm:$0xf]
        %v992 = vld [vmem:[%s988 + $0x10] sm:$0xf]
        %v993 = vld [vmem:[%s988 + $0x18] sm:$0xf]
        %v994 = vld [vmem:[%s988 + $0x1c] sm:$0xf]
        %v995 = vld [vmem:[%s988 + $0x24] sm:$0xf]
        %v996 = vld [vmem:[%s988 + $0x28] sm:$0xf]
        %v997 = vld [vmem:[%s988 + $0x30] sm:$0xf]
        %v998 = vld [vmem:[%s988 + $0x34] sm:$0xf]
        %v999 = vld [vmem:[%s988 + $0x3c] sm:$0xf]
        %v1000 = vld [vmem:[%s988 + $0x40] sm:$0xf]
        %v1001 = vld [vmem:[%s988 + $0x48] sm:$0xf]
        %v1002 = vld [vmem:[%s988 + $0x4c] sm:$0xf]
        %v1003 = vld [vmem:[%s988 + $0x54] sm:$0xf]
        %v1004 = vld [vmem:[%s988 + $0x58] sm:$0xf]
        %s1005 = scalar_lea.vmem %s1, 24
        %v1006 = vld [vmem:[%s1005] sm:$0xf]
        %v1007 = vld [vmem:[%s1005 + $0x4] sm:$0xf]
        %v1024 = vunpack.c.l.b16 %v989
        %v1025 = vunpack.c.l.b16 %v990
        %v1026 = vunpack.c.l.b16 %v991
        %v1027 = vunpack.c.l.b16 %v992
        %v1028 = vunpack.c.l.b16 %v993
        %v1029 = vunpack.c.l.b16 %v994
        %v1030 = vunpack.c.l.b16 %v995
        %v1031 = vunpack.c.l.b16 %v996
        %v1032 = vunpack.c.l.b16 %v997
        %v1033 = vunpack.c.l.b16 %v998
        %v1034 = vunpack.c.l.b16 %v999
        %v1035 = vunpack.c.l.b16 %v1000
        %v1036 = vunpack.c.l.b16 %v1001
        %v1037 = vunpack.c.l.b16 %v1002
        %v1038 = vunpack.c.l.b16 %v1003
        %v1039 = vunpack.c.l.b16 %v1004
        %v1040 = vpack.c.b16 %v1025, %v1024
        %v1041 = vpack.c.b16 %v1027, %v1026
        %v1042 = vpack.c.b16 %v1029, %v1028
        %v1043 = vpack.c.b16 %v1031, %v1030
        %v1044 = vpack.c.b16 %v1033, %v1032
        %v1045 = vpack.c.b16 %v1035, %v1034
        %v1046 = vpack.c.b16 %v1037, %v1036
        %v1047 = vpack.c.b16 %v1039, %v1038
        %v1050 = vunpack.c.l.b16 %v1006
        %v1051 = vunpack.c.l.b16 %v1007
        %v1052 = vpack.c.b16 %v1051, %v1050
        %v1055 = vsel %vm443, %v1040, 0
        %v1058 = vsel %vm443, %v1041, 0
        %v1061 = vsel %vm443, %v1042, 0
        %v1064 = vsel %vm443, %v1043, 0
        %v1067 = vsel %vm443, %v1044, 0
        %v1070 = vsel %vm443, %v1045, 0
        %v1073 = vsel %vm443, %v1046, 0
        %v1076 = vsel %vm443, %v1047, 0
        %1078 = vmatprep.subr.bf16.mxu0 0
        %1079 = vmatpush1.bf16.msra.mxu0 %v1052
        %1080 = vmatprep.subr.bf16.mxu0 0
        %1081 = vmatpush1.bf16.msra.mxu0 0
        %1082 = vmatprep.subr.bf16.mxu0 0
        %1083 = vmatpush1.bf16.msra.mxu0 0
        %1084 = vmatprep.subr.bf16.mxu0 0
        %1085 = vmatpush1.bf16.msra.mxu0 0
        %1086 = vmatprep.subr.bf16.mxu0 0
        %1087 = vmatpush1.bf16.msra.mxu0 0
        %1088 = vmatprep.subr.bf16.mxu0 0
        %1089 = vmatpush1.bf16.msra.mxu0 0
        %1090 = vmatprep.subr.bf16.mxu0 0
        %1091 = vmatpush1.bf16.msra.mxu0 0
        %1092 = vmatprep.subr.bf16.mxu0 0
        %1093 = vmatpush1.bf16.msra.mxu0 0
        %1094 = vmatprep.subr.bf16.mxu0 0
        %1095 = vmatpush1.bf16.msra.mxu0 0
        %1096 = vmatprep.subr.bf16.mxu0 0
        %1097 = vmatpush1.bf16.msra.mxu0 0
        %1098 = vmatprep.subr.bf16.mxu0 0
        %1099 = vmatpush1.bf16.msra.mxu0 0
        %1100 = vmatprep.subr.bf16.mxu0 0
        %1101 = vmatpush1.bf16.msra.mxu0 0
        %1102 = vmatprep.subr.bf16.mxu0 0
        %1103 = vmatpush1.bf16.msra.mxu0 0
        %1104 = vmatprep.subr.bf16.mxu0 0
        %1105 = vmatpush1.bf16.msra.mxu0 0
        %1106 = vmatprep.subr.bf16.mxu0 0
        %1107 = vmatpush1.bf16.msra.mxu0 0
        %1108 = vmatprep.subr.bf16.mxu0 0
        %1109 = vmatpush1.bf16.msra.mxu0 0
        %1110 = vmatprep.mubr.bf16.mxu0 0
        %1111 = vmatmul.mubr.bf16.gmra.mrb[0].mxu0 %v1055
        %v1112 = vpop.f32.mrb[0].mxu0
        %v1113 = vadd.f32 0.0, %v1112
        %v1114 = vpop.f32.mrb[0].mxu0
        %v1115 = vpop.f32.mrb[0].mxu0
        %v1116 = vadd.f32 0.0, %v1115
        %v1117 = vpop.f32.mrb[0].mxu0
        %1118 = vmatprep.mubr.bf16.mxu0 0
        %1119 = vmatmul.mubr.bf16.gmra.mrb[0].mxu0 %v1058
        %v1120 = vpop.f32.mrb[0].mxu0
        %v1121 = vadd.f32 0.0, %v1120
        %v1122 = vpop.f32.mrb[0].mxu0
        %v1123 = vpop.f32.mrb[0].mxu0
        %v1124 = vadd.f32 0.0, %v1123
        %v1125 = vpop.f32.mrb[0].mxu0
        %1126 = vmatprep.mubr.bf16.mxu0 0
        %1127 = vmatmul.mubr.bf16.gmra.mrb[0].mxu0 %v1061
        %v1128 = vpop.f32.mrb[0].mxu0
        %v1129 = vadd.f32 0.0, %v1128
        %v1130 = vpop.f32.mrb[0].mxu0
        %v1131 = vpop.f32.mrb[0].mxu0
        %v1132 = vadd.f32 0.0, %v1131
        %v1133 = vpop.f32.mrb[0].mxu0
        %1134 = vmatprep.mubr.bf16.mxu0 0
        %1135 = vmatmul.mubr.bf16.gmra.mrb[0].mxu0 %v1064
        %v1136 = vpop.f32.mrb[0].mxu0
        %v1137 = vadd.f32 0.0, %v1136
        %v1138 = vpop.f32.mrb[0].mxu0
        %v1139 = vpop.f32.mrb[0].mxu0
        %v1140 = vadd.f32 0.0, %v1139
        %v1141 = vpop.f32.mrb[0].mxu0
        %1142 = vmatprep.mubr.bf16.mxu0 0
        %1143 = vmatmul.mubr.bf16.gmra.mrb[0].mxu0 %v1067
        %v1144 = vpop.f32.mrb[0].mxu0
        %v1145 = vadd.f32 0.0, %v1144
        %v1146 = vpop.f32.mrb[0].mxu0
        %v1147 = vpop.f32.mrb[0].mxu0
        %v1148 = vadd.f32 0.0, %v1147
        %v1149 = vpop.f32.mrb[0].mxu0
        %1150 = vmatprep.mubr.bf16.mxu0 0
        %1151 = vmatmul.mubr.bf16.gmra.mrb[0].mxu0 %v1070
        %v1152 = vpop.f32.mrb[0].mxu0
        %v1153 = vadd.f32 0.0, %v1152
        %v1154 = vpop.f32.mrb[0].mxu0
        %v1155 = vpop.f32.mrb[0].mxu0
        %v1156 = vadd.f32 0.0, %v1155
        %v1157 = vpop.f32.mrb[0].mxu0
        %1158 = vmatprep.mubr.bf16.mxu0 0
        %1159 = vmatmul.mubr.bf16.gmra.mrb[0].mxu0 %v1073
        %v1160 = vpop.f32.mrb[0].mxu0
        %v1161 = vadd.f32 0.0, %v1160
        %v1162 = vpop.f32.mrb[0].mxu0
        %v1163 = vpop.f32.mrb[0].mxu0
        %v1164 = vadd.f32 0.0, %v1163
        %v1165 = vpop.f32.mrb[0].mxu0
        %1166 = vmatprep.mubr.bf16.mxu0 0
        %1167 = vmatmul.mubr.bf16.gmra.mrb[0].mxu0 %v1076
        %v1168 = vpop.f32.mrb[0].mxu0
        %v1169 = vadd.f32 0.0, %v1168
        %v1170 = vpop.f32.mrb[0].mxu0
        %v1171 = vpop.f32.mrb[0].mxu0
        %v1172 = vadd.f32 0.0, %v1171
        %v1173 = vpop.f32.mrb[0].mxu0
        %1174 = vdwg.mxu0
        %v1175 = vadd.f32 %v969, %v1113
        %v1176 = vadd.f32 %v970, %v1116
        %v1177 = vadd.f32 %v971, %v1121
        %v1178 = vadd.f32 %v972, %v1124
        %v1179 = vadd.f32 %v973, %v1129
        %v1180 = vadd.f32 %v974, %v1132
        %v1181 = vadd.f32 %v975, %v1137
        %v1182 = vadd.f32 %v976, %v1140
        %v1183 = vadd.f32 %v977, %v1145
        %v1184 = vadd.f32 %v978, %v1148
        %v1185 = vadd.f32 %v979, %v1153
        %v1186 = vadd.f32 %v980, %v1156
        %v1187 = vadd.f32 %v981, %v1161
        %v1188 = vadd.f32 %v982, %v1164
        %v1189 = vadd.f32 %v983, %v1169
        %v1190 = vadd.f32 %v984, %v1172
        %v1191 = vld [vmem:[%s988] sm:$0xf]
        %v1192 = vld [vmem:[%s988 + $0x4] sm:$0xf]
        %v1193 = vld [vmem:[%s988 + $0x8] sm:$0x1]
        %v1194 = vld [vmem:[%s988 + $0xc] sm:$0xf]
        %v1195 = vld [vmem:[%s988 + $0x10] sm:$0xf]
        %v1196 = vld [vmem:[%s988 + $0x14] sm:$0x1]
        %v1197 = vld [vmem:[%s988 + $0x18] sm:$0xf]
        %v1198 = vld [vmem:[%s988 + $0x1c] sm:$0xf]
        %v1199 = vld [vmem:[%s988 + $0x20] sm:$0x1]
        %v1200 = vld [vmem:[%s988 + $0x24] sm:$0xf]
        %v1201 = vld [vmem:[%s988 + $0x28] sm:$0xf]
        %v1202 = vld [vmem:[%s988 + $0x2c] sm:$0x1]
        %v1203 = vld [vmem:[%s988 + $0x30] sm:$0xf]
        %v1204 = vld [vmem:[%s988 + $0x34] sm:$0xf]
        %v1205 = vld [vmem:[%s988 + $0x38] sm:$0x1]
        %v1206 = vld [vmem:[%s988 + $0x3c] sm:$0xf]
        %v1207 = vld [vmem:[%s988 + $0x40] sm:$0xf]
        %v1208 = vld [vmem:[%s988 + $0x44] sm:$0x1]
        %v1209 = vld [vmem:[%s988 + $0x48] sm:$0xf]
        %v1210 = vld [vmem:[%s988 + $0x4c] sm:$0xf]
        %v1211 = vld [vmem:[%s988 + $0x50] sm:$0x1]
        %v1212 = vld [vmem:[%s988 + $0x54] sm:$0xf]
        %v1213 = vld [vmem:[%s988 + $0x58] sm:$0xf]
        %v1214 = vld [vmem:[%s988 + $0x5c] sm:$0x1]
        %v1216 = vshrl.u32 %v1191, 16
        %v1218 = vrot.slane %v1216, 4
        %v1219 = vshll.u32 %v1191, 16
        %v1221 = vrot.slane %v1219, 5
        %v1222 = vor.u32 %v1218, %v1221
        %v1223 = vrot.slane %v1222, 4
        %v1225 = vshll.u32 %v1192, 16
        %v1227 = vrot.slane %v1225, 5
        %v1228 = vsel %vm217, %v1223, %v1227
        %v1229 = vshrl.u32 %v1192, 16
        %v1231 = vrot.slane %v1229, 4
        %v1232 = vor.u32 %v1231, %v1227
        %v1233 = vrot.slane %v1232, 4
        %v1235 = vshll.u32 %v1193, 16
        %v1237 = vrot.slane %v1235, 5
        %v1238 = vsel %vm217, %v1233, %v1237
        %v1240 = vshrl.u32 %v1194, 16
        %v1242 = vrot.slane %v1240, 4
        %v1243 = vshll.u32 %v1194, 16
        %v1245 = vrot.slane %v1243, 5
        %v1246 = vor.u32 %v1242, %v1245
        %v1247 = vrot.slane %v1246, 4
        %v1249 = vshll.u32 %v1195, 16
        %v1251 = vrot.slane %v1249, 5
        %v1252 = vsel %vm217, %v1247, %v1251
        %v1253 = vshrl.u32 %v1195, 16
        %v1255 = vrot.slane %v1253, 4
        %v1256 = vor.u32 %v1255, %v1251
        %v1257 = vrot.slane %v1256, 4
        %v1259 = vshll.u32 %v1196, 16
        %v1261 = vrot.slane %v1259, 5
        %v1262 = vsel %vm217, %v1257, %v1261
        %v1264 = vshrl.u32 %v1197, 16
        %v1266 = vrot.slane %v1264, 4
        %v1267 = vshll.u32 %v1197, 16
        %v1269 = vrot.slane %v1267, 5
        %v1270 = vor.u32 %v1266, %v1269
        %v1271 = vrot.slane %v1270, 4
        %v1273 = vshll.u32 %v1198, 16
        %v1275 = vrot.slane %v1273, 5
        %v1276 = vsel %vm217, %v1271, %v1275
        %v1277 = vshrl.u32 %v1198, 16
        %v1279 = vrot.slane %v1277, 4
        %v1280 = vor.u32 %v1279, %v1275
        %v1281 = vrot.slane %v1280, 4
        %v1283 = vshll.u32 %v1199, 16
        %v1285 = vrot.slane %v1283, 5
        %v1286 = vsel %vm217, %v1281, %v1285
        %v1288 = vshrl.u32 %v1200, 16
        %v1290 = vrot.slane %v1288, 4
        %v1291 = vshll.u32 %v1200, 16
        %v1293 = vrot.slane %v1291, 5
        %v1294 = vor.u32 %v1290, %v1293
        %v1295 = vrot.slane %v1294, 4
        %v1297 = vshll.u32 %v1201, 16
        %v1299 = vrot.slane %v1297, 5
        %v1300 = vsel %vm217, %v1295, %v1299
        %v1301 = vshrl.u32 %v1201, 16
        %v1303 = vrot.slane %v1301, 4
        %v1304 = vor.u32 %v1303, %v1299
        %v1305 = vrot.slane %v1304, 4
        %v1307 = vshll.u32 %v1202, 16
        %v1309 = vrot.slane %v1307, 5
        %v1310 = vsel %vm217, %v1305, %v1309
        %v1312 = vshrl.u32 %v1203, 16
        %v1314 = vrot.slane %v1312, 4
        %v1315 = vshll.u32 %v1203, 16
        %v1317 = vrot.slane %v1315, 5
        %v1318 = vor.u32 %v1314, %v1317
        %v1319 = vrot.slane %v1318, 4
        %v1321 = vshll.u32 %v1204, 16
        %v1323 = vrot.slane %v1321, 5
        %v1324 = vsel %vm217, %v1319, %v1323
        %v1325 = vshrl.u32 %v1204, 16
        %v1327 = vrot.slane %v1325, 4
        %v1328 = vor.u32 %v1327, %v1323
        %v1329 = vrot.slane %v1328, 4
        %v1331 = vshll.u32 %v1205, 16
        %v1333 = vrot.slane %v1331, 5
        %v1334 = vsel %vm217, %v1329, %v1333
        %v1336 = vshrl.u32 %v1206, 16
        %v1338 = vrot.slane %v1336, 4
        %v1339 = vshll.u32 %v1206, 16
        %v1341 = vrot.slane %v1339, 5
        %v1342 = vor.u32 %v1338, %v1341
        %v1343 = vrot.slane %v1342, 4
        %v1345 = vshll.u32 %v1207, 16
        %v1347 = vrot.slane %v1345, 5
        %v1348 = vsel %vm217, %v1343, %v1347
        %v1349 = vshrl.u32 %v1207, 16
        %v1351 = vrot.slane %v1349, 4
        %v1352 = vor.u32 %v1351, %v1347
        %v1353 = vrot.slane %v1352, 4
        %v1355 = vshll.u32 %v1208, 16
        %v1357 = vrot.slane %v1355, 5
        %v1358 = vsel %vm217, %v1353, %v1357
        %v1360 = vshrl.u32 %v1209, 16
        %v1362 = vrot.slane %v1360, 4
        %v1363 = vshll.u32 %v1209, 16
        %v1365 = vrot.slane %v1363, 5
        %v1366 = vor.u32 %v1362, %v1365
        %v1367 = vrot.slane %v1366, 4
        %v1369 = vshll.u32 %v1210, 16
        %v1371 = vrot.slane %v1369, 5
        %v1372 = vsel %vm217, %v1367, %v1371
        %v1373 = vshrl.u32 %v1210, 16
        %v1375 = vrot.slane %v1373, 4
        %v1376 = vor.u32 %v1375, %v1371
        %v1377 = vrot.slane %v1376, 4
        %v1379 = vshll.u32 %v1211, 16
        %v1381 = vrot.slane %v1379, 5
        %v1382 = vsel %vm217, %v1377, %v1381
        %v1384 = vshrl.u32 %v1212, 16
        %v1386 = vrot.slane %v1384, 4
        %v1387 = vshll.u32 %v1212, 16
        %v1389 = vrot.slane %v1387, 5
        %v1390 = vor.u32 %v1386, %v1389
        %v1391 = vrot.slane %v1390, 4
        %v1393 = vshll.u32 %v1213, 16
        %v1395 = vrot.slane %v1393, 5
        %v1396 = vsel %vm217, %v1391, %v1395
        %v1397 = vshrl.u32 %v1213, 16
        %v1399 = vrot.slane %v1397, 4
        %v1400 = vor.u32 %v1399, %v1395
        %v1401 = vrot.slane %v1400, 4
        %v1403 = vshll.u32 %v1214, 16
        %v1405 = vrot.slane %v1403, 5
        %v1406 = vsel %vm217, %v1401, %v1405
        %s1407 = scalar_lea.vmem %s1, 32
        %v1408 = vld [vmem:[%s1407] sm:$0xf]
        %v1409 = vld [vmem:[%s1407 + $0x4] sm:$0xf]
        %v1410 = vunpack.c.l.b16 %v1228
        %v1411 = vunpack.c.l.b16 %v1238
        %v1412 = vunpack.c.l.b16 %v1252
        %v1413 = vunpack.c.l.b16 %v1262
        %v1414 = vunpack.c.l.b16 %v1276
        %v1415 = vunpack.c.l.b16 %v1286
        %v1416 = vunpack.c.l.b16 %v1300
        %v1417 = vunpack.c.l.b16 %v1310
        %v1418 = vunpack.c.l.b16 %v1324
        %v1419 = vunpack.c.l.b16 %v1334
        %v1420 = vunpack.c.l.b16 %v1348
        %v1421 = vunpack.c.l.b16 %v1358
        %v1422 = vunpack.c.l.b16 %v1372
        %v1423 = vunpack.c.l.b16 %v1382
        %v1424 = vunpack.c.l.b16 %v1396
        %v1425 = vunpack.c.l.b16 %v1406
        %v1426 = vpack.c.b16 %v1411, %v1410
        %v1427 = vpack.c.b16 %v1413, %v1412
        %v1428 = vpack.c.b16 %v1415, %v1414
        %v1429 = vpack.c.b16 %v1417, %v1416
        %v1430 = vpack.c.b16 %v1419, %v1418
        %v1431 = vpack.c.b16 %v1421, %v1420
        %v1432 = vpack.c.b16 %v1423, %v1422
        %v1433 = vpack.c.b16 %v1425, %v1424
        %v1436 = vunpack.c.l.b16 %v1408
        %v1437 = vunpack.c.l.b16 %v1409
        %v1438 = vpack.c.b16 %v1437, %v1436
        %v1441 = vsel %vm443, %v1426, 0
        %v1444 = vsel %vm443, %v1427, 0
        %v1447 = vsel %vm443, %v1428, 0
        %v1450 = vsel %vm443, %v1429, 0
        %v1453 = vsel %vm443, %v1430, 0
        %v1456 = vsel %vm443, %v1431, 0
        %v1459 = vsel %vm443, %v1432, 0
        %v1462 = vsel %vm443, %v1433, 0
        %1464 = vmatprep.subr.bf16.mxu0 0
        %1465 = vmatpush1.bf16.msra.mxu0 %v1438
        %1466 = vmatprep.subr.bf16.mxu0 0
        %1467 = vmatpush1.bf16.msra.mxu0 0
        %1468 = vmatprep.subr.bf16.mxu0 0
        %1469 = vmatpush1.bf16.msra.mxu0 0
        %1470 = vmatprep.subr.bf16.mxu0 0
        %1471 = vmatpush1.bf16.msra.mxu0 0
        %1472 = vmatprep.subr.bf16.mxu0 0
        %1473 = vmatpush1.bf16.msra.mxu0 0
        %1474 = vmatprep.subr.bf16.mxu0 0
        %1475 = vmatpush1.bf16.msra.mxu0 0
        %1476 = vmatprep.subr.bf16.mxu0 0
        %1477 = vmatpush1.bf16.msra.mxu0 0
        %1478 = vmatprep.subr.bf16.mxu0 0
        %1479 = vmatpush1.bf16.msra.mxu0 0
        %1480 = vmatprep.subr.bf16.mxu0 0
        %1481 = vmatpush1.bf16.msra.mxu0 0
        %1482 = vmatprep.subr.bf16.mxu0 0
        %1483 = vmatpush1.bf16.msra.mxu0 0
        %1484 = vmatprep.subr.bf16.mxu0 0
        %1485 = vmatpush1.bf16.msra.mxu0 0
        %1486 = vmatprep.subr.bf16.mxu0 0
        %1487 = vmatpush1.bf16.msra.mxu0 0
        %1488 = vmatprep.subr.bf16.mxu0 0
        %1489 = vmatpush1.bf16.msra.mxu0 0
        %1490 = vmatprep.subr.bf16.mxu0 0
        %1491 = vmatpush1.bf16.msra.mxu0 0
        %1492 = vmatprep.subr.bf16.mxu0 0
        %1493 = vmatpush1.bf16.msra.mxu0 0
        %1494 = vmatprep.subr.bf16.mxu0 0
        %1495 = vmatpush1.bf16.msra.mxu0 0
        %1496 = vmatprep.mubr.bf16.mxu0 0
        %1497 = vmatmul.mubr.bf16.gmra.mrb[0].mxu0 %v1441
        %v1498 = vpop.f32.mrb[0].mxu0
        %v1499 = vadd.f32 0.0, %v1498
        %v1500 = vpop.f32.mrb[0].mxu0
        %v1501 = vpop.f32.mrb[0].mxu0
        %v1502 = vadd.f32 0.0, %v1501
        %v1503 = vpop.f32.mrb[0].mxu0
        %1504 = vmatprep.mubr.bf16.mxu0 0
        %1505 = vmatmul.mubr.bf16.gmra.mrb[0].mxu0 %v1444
        %v1506 = vpop.f32.mrb[0].mxu0
        %v1507 = vadd.f32 0.0, %v1506
        %v1508 = vpop.f32.mrb[0].mxu0
        %v1509 = vpop.f32.mrb[0].mxu0
        %v1510 = vadd.f32 0.0, %v1509
        %v1511 = vpop.f32.mrb[0].mxu0
        %1512 = vmatprep.mubr.bf16.mxu0 0
        %1513 = vmatmul.mubr.bf16.gmra.mrb[0].mxu0 %v1447
        %v1514 = vpop.f32.mrb[0].mxu0
        %v1515 = vadd.f32 0.0, %v1514
        %v1516 = vpop.f32.mrb[0].mxu0
        %v1517 = vpop.f32.mrb[0].mxu0
        %v1518 = vadd.f32 0.0, %v1517
        %v1519 = vpop.f32.mrb[0].mxu0
        %1520 = vmatprep.mubr.bf16.mxu0 0
        %1521 = vmatmul.mubr.bf16.gmra.mrb[0].mxu0 %v1450
        %v1522 = vpop.f32.mrb[0].mxu0
        %v1523 = vadd.f32 0.0, %v1522
        %v1524 = vpop.f32.mrb[0].mxu0
        %v1525 = vpop.f32.mrb[0].mxu0
        %v1526 = vadd.f32 0.0, %v1525
        %v1527 = vpop.f32.mrb[0].mxu0
        %1528 = vmatprep.mubr.bf16.mxu0 0
        %1529 = vmatmul.mubr.bf16.gmra.mrb[0].mxu0 %v1453
        %v1530 = vpop.f32.mrb[0].mxu0
        %v1531 = vadd.f32 0.0, %v1530
        %v1532 = vpop.f32.mrb[0].mxu0
        %v1533 = vpop.f32.mrb[0].mxu0
        %v1534 = vadd.f32 0.0, %v1533
        %v1535 = vpop.f32.mrb[0].mxu0
        %1536 = vmatprep.mubr.bf16.mxu0 0
        %1537 = vmatmul.mubr.bf16.gmra.mrb[0].mxu0 %v1456
        %v1538 = vpop.f32.mrb[0].mxu0
        %v1539 = vadd.f32 0.0, %v1538
        %v1540 = vpop.f32.mrb[0].mxu0
        %v1541 = vpop.f32.mrb[0].mxu0
        %v1542 = vadd.f32 0.0, %v1541
        %v1543 = vpop.f32.mrb[0].mxu0
        %1544 = vmatprep.mubr.bf16.mxu0 0
        %1545 = vmatmul.mubr.bf16.gmra.mrb[0].mxu0 %v1459
        %v1546 = vpop.f32.mrb[0].mxu0
        %v1547 = vadd.f32 0.0, %v1546
        %v1548 = vpop.f32.mrb[0].mxu0
        %v1549 = vpop.f32.mrb[0].mxu0
        %v1550 = vadd.f32 0.0, %v1549
        %v1551 = vpop.f32.mrb[0].mxu0
        %1552 = vmatprep.mubr.bf16.mxu0 0
        %1553 = vmatmul.mubr.bf16.gmra.mrb[0].mxu0 %v1462
        %v1554 = vpop.f32.mrb[0].mxu0
        %v1555 = vadd.f32 0.0, %v1554
        %v1556 = vpop.f32.mrb[0].mxu0
        %v1557 = vpop.f32.mrb[0].mxu0
        %v1558 = vadd.f32 0.0, %v1557
        %v1559 = vpop.f32.mrb[0].mxu0
        %1560 = vdwg.mxu0
        %v1561 = vadd.f32 %v1175, %v1499
        %v1562 = vadd.f32 %v1176, %v1502
        %v1563 = vadd.f32 %v1177, %v1507
        %v1564 = vadd.f32 %v1178, %v1510
        %v1565 = vadd.f32 %v1179, %v1515
        %v1566 = vadd.f32 %v1180, %v1518
        %v1567 = vadd.f32 %v1181, %v1523
        %v1568 = vadd.f32 %v1182, %v1526
        %v1569 = vadd.f32 %v1183, %v1531
        %v1570 = vadd.f32 %v1184, %v1534
        %v1571 = vadd.f32 %v1185, %v1539
        %v1572 = vadd.f32 %v1186, %v1542
        %v1573 = vadd.f32 %v1187, %v1547
        %v1574 = vadd.f32 %v1188, %v1550
        %v1575 = vadd.f32 %v1189, %v1555
        %v1576 = vadd.f32 %v1190, %v1558
        %v1577 = vld [vmem:[%s988] sm:$0xe]
        %v1578 = vld [vmem:[%s988 + $0xc] sm:$0xe]
        %v1579 = vld [vmem:[%s988 + $0x18] sm:$0xe]
        %v1580 = vld [vmem:[%s988 + $0x24] sm:$0xe]
        %v1581 = vld [vmem:[%s988 + $0x30] sm:$0xe]
        %v1582 = vld [vmem:[%s988 + $0x3c] sm:$0xe]
        %v1583 = vld [vmem:[%s988 + $0x48] sm:$0xe]
        %v1584 = vld [vmem:[%s988 + $0x54] sm:$0xe]
        %v1609 = vrot.slane %v1577, 5
        %v1610 = vrot.slane %v1609, 4
        %v1611 = vrot.slane %v1192, 5
        %v1612 = vsel %vm758, %v1610, %v1611
        %v1613 = vrot.slane %v1611, 4
        %v1614 = vrot.slane %v1193, 5
        %v1615 = vsel %vm758, %v1613, %v1614
        %v1616 = vrot.slane %v1578, 5
        %v1617 = vrot.slane %v1616, 4
        %v1618 = vrot.slane %v1195, 5
        %v1619 = vsel %vm758, %v1617, %v1618
        %v1620 = vrot.slane %v1618, 4
        %v1621 = vrot.slane %v1196, 5
        %v1622 = vsel %vm758, %v1620, %v1621
        %v1623 = vrot.slane %v1579, 5
        %v1624 = vrot.slane %v1623, 4
        %v1625 = vrot.slane %v1198, 5
        %v1626 = vsel %vm758, %v1624, %v1625
        %v1627 = vrot.slane %v1625, 4
        %v1628 = vrot.slane %v1199, 5
        %v1629 = vsel %vm758, %v1627, %v1628
        %v1630 = vrot.slane %v1580, 5
        %v1631 = vrot.slane %v1630, 4
        %v1632 = vrot.slane %v1201, 5
        %v1633 = vsel %vm758, %v1631, %v1632
        %v1634 = vrot.slane %v1632, 4
        %v1635 = vrot.slane %v1202, 5
        %v1636 = vsel %vm758, %v1634, %v1635
        %v1637 = vrot.slane %v1581, 5
        %v1638 = vrot.slane %v1637, 4
        %v1639 = vrot.slane %v1204, 5
        %v1640 = vsel %vm758, %v1638, %v1639
        %v1641 = vrot.slane %v1639, 4
        %v1642 = vrot.slane %v1205, 5
        %v1643 = vsel %vm758, %v1641, %v1642
        %v1644 = vrot.slane %v1582, 5
        %v1645 = vrot.slane %v1644, 4
        %v1646 = vrot.slane %v1207, 5
        %v1647 = vsel %vm758, %v1645, %v1646
        %v1648 = vrot.slane %v1646, 4
        %v1649 = vrot.slane %v1208, 5
        %v1650 = vsel %vm758, %v1648, %v1649
        %v1651 = vrot.slane %v1583, 5
        %v1652 = vrot.slane %v1651, 4
        %v1653 = vrot.slane %v1210, 5
        %v1654 = vsel %vm758, %v1652, %v1653
        %v1655 = vrot.slane %v1653, 4
        %v1656 = vrot.slane %v1211, 5
        %v1657 = vsel %vm758, %v1655, %v1656
        %v1658 = vrot.slane %v1584, 5
        %v1659 = vrot.slane %v1658, 4
        %v1660 = vrot.slane %v1213, 5
        %v1661 = vsel %vm758, %v1659, %v1660
        %v1662 = vrot.slane %v1660, 4
        %v1663 = vrot.slane %v1214, 5
        %v1664 = vsel %vm758, %v1662, %v1663
        %s1665 = scalar_lea.vmem %s1, 40
        %v1666 = vld [vmem:[%s1665] sm:$0xf]
        %v1667 = vld [vmem:[%s1665 + $0x4] sm:$0xf]
        %v1668 = vunpack.c.l.b16 %v1612
        %v1669 = vunpack.c.l.b16 %v1615
        %v1670 = vunpack.c.l.b16 %v1619
        %v1671 = vunpack.c.l.b16 %v1622
        %v1672 = vunpack.c.l.b16 %v1626
        %v1673 = vunpack.c.l.b16 %v1629
        %v1674 = vunpack.c.l.b16 %v1633
        %v1675 = vunpack.c.l.b16 %v1636
        %v1676 = vunpack.c.l.b16 %v1640
        %v1677 = vunpack.c.l.b16 %v1643
        %v1678 = vunpack.c.l.b16 %v1647
        %v1679 = vunpack.c.l.b16 %v1650
        %v1680 = vunpack.c.l.b16 %v1654
        %v1681 = vunpack.c.l.b16 %v1657
        %v1682 = vunpack.c.l.b16 %v1661
        %v1683 = vunpack.c.l.b16 %v1664
        %v1684 = vpack.c.b16 %v1669, %v1668
        %v1685 = vpack.c.b16 %v1671, %v1670
        %v1686 = vpack.c.b16 %v1673, %v1672
        %v1687 = vpack.c.b16 %v1675, %v1674
        %v1688 = vpack.c.b16 %v1677, %v1676
        %v1689 = vpack.c.b16 %v1679, %v1678
        %v1690 = vpack.c.b16 %v1681, %v1680
        %v1691 = vpack.c.b16 %v1683, %v1682
        %v1694 = vunpack.c.l.b16 %v1666
        %v1695 = vunpack.c.l.b16 %v1667
        %v1696 = vpack.c.b16 %v1695, %v1694
        %v1699 = vsel %vm443, %v1684, 0
        %v1702 = vsel %vm443, %v1685, 0
        %v1705 = vsel %vm443, %v1686, 0
        %v1708 = vsel %vm443, %v1687, 0
        %v1711 = vsel %vm443, %v1688, 0
        %v1714 = vsel %vm443, %v1689, 0
        %v1717 = vsel %vm443, %v1690, 0
        %v1720 = vsel %vm443, %v1691, 0
        %1722 = vmatprep.subr.bf16.mxu0 0
        %1723 = vmatpush1.bf16.msra.mxu0 %v1696
        %1724 = vmatprep.subr.bf16.mxu0 0
        %1725 = vmatpush1.bf16.msra.mxu0 0
        %1726 = vmatprep.subr.bf16.mxu0 0
        %1727 = vmatpush1.bf16.msra.mxu0 0
        %1728 = vmatprep.subr.bf16.mxu0 0
        %1729 = vmatpush1.bf16.msra.mxu0 0
        %1730 = vmatprep.subr.bf16.mxu0 0
        %1731 = vmatpush1.bf16.msra.mxu0 0
        %1732 = vmatprep.subr.bf16.mxu0 0
        %1733 = vmatpush1.bf16.msra.mxu0 0
        %1734 = vmatprep.subr.bf16.mxu0 0
        %1735 = vmatpush1.bf16.msra.mxu0 0
        %1736 = vmatprep.subr.bf16.mxu0 0
        %1737 = vmatpush1.bf16.msra.mxu0 0
        %1738 = vmatprep.subr.bf16.mxu0 0
        %1739 = vmatpush1.bf16.msra.mxu0 0
        %1740 = vmatprep.subr.bf16.mxu0 0
        %1741 = vmatpush1.bf16.msra.mxu0 0
        %1742 = vmatprep.subr.bf16.mxu0 0
        %1743 = vmatpush1.bf16.msra.mxu0 0
        %1744 = vmatprep.subr.bf16.mxu0 0
        %1745 = vmatpush1.bf16.msra.mxu0 0
        %1746 = vmatprep.subr.bf16.mxu0 0
        %1747 = vmatpush1.bf16.msra.mxu0 0
        %1748 = vmatprep.subr.bf16.mxu0 0
        %1749 = vmatpush1.bf16.msra.mxu0 0
        %1750 = vmatprep.subr.bf16.mxu0 0
        %1751 = vmatpush1.bf16.msra.mxu0 0
        %1752 = vmatprep.subr.bf16.mxu0 0
        %1753 = vmatpush1.bf16.msra.mxu0 0
        %1754 = vmatprep.mubr.bf16.mxu0 0
        %1755 = vmatmul.mubr.bf16.gmra.mrb[0].mxu0 %v1699
        %v1756 = vpop.f32.mrb[0].mxu0
        %v1757 = vadd.f32 0.0, %v1756
        %v1758 = vpop.f32.mrb[0].mxu0
        %v1759 = vpop.f32.mrb[0].mxu0
        %v1760 = vadd.f32 0.0, %v1759
        %v1761 = vpop.f32.mrb[0].mxu0
        %1762 = vmatprep.mubr.bf16.mxu0 0
        %1763 = vmatmul.mubr.bf16.gmra.mrb[0].mxu0 %v1702
        %v1764 = vpop.f32.mrb[0].mxu0
        %v1765 = vadd.f32 0.0, %v1764
        %v1766 = vpop.f32.mrb[0].mxu0
        %v1767 = vpop.f32.mrb[0].mxu0
        %v1768 = vadd.f32 0.0, %v1767
        %v1769 = vpop.f32.mrb[0].mxu0
        %1770 = vmatprep.mubr.bf16.mxu0 0
        %1771 = vmatmul.mubr.bf16.gmra.mrb[0].mxu0 %v1705
        %v1772 = vpop.f32.mrb[0].mxu0
        %v1773 = vadd.f32 0.0, %v1772
        %v1774 = vpop.f32.mrb[0].mxu0
        %v1775 = vpop.f32.mrb[0].mxu0
        %v1776 = vadd.f32 0.0, %v1775
        %v1777 = vpop.f32.mrb[0].mxu0
        %1778 = vmatprep.mubr.bf16.mxu0 0
        %1779 = vmatmul.mubr.bf16.gmra.mrb[0].mxu0 %v1708
        %v1780 = vpop.f32.mrb[0].mxu0
        %v1781 = vadd.f32 0.0, %v1780
        %v1782 = vpop.f32.mrb[0].mxu0
        %v1783 = vpop.f32.mrb[0].mxu0
        %v1784 = vadd.f32 0.0, %v1783
        %v1785 = vpop.f32.mrb[0].mxu0
        %1786 = vmatprep.mubr.bf16.mxu0 0
        %1787 = vmatmul.mubr.bf16.gmra.mrb[0].mxu0 %v1711
        %v1788 = vpop.f32.mrb[0].mxu0
        %v1789 = vadd.f32 0.0, %v1788
        %v1790 = vpop.f32.mrb[0].mxu0
        %v1791 = vpop.f32.mrb[0].mxu0
        %v1792 = vadd.f32 0.0, %v1791
        %v1793 = vpop.f32.mrb[0].mxu0
        %1794 = vmatprep.mubr.bf16.mxu0 0
        %1795 = vmatmul.mubr.bf16.gmra.mrb[0].mxu0 %v1714
        %v1796 = vpop.f32.mrb[0].mxu0
        %v1797 = vadd.f32 0.0, %v1796
        %v1798 = vpop.f32.mrb[0].mxu0
        %v1799 = vpop.f32.mrb[0].mxu0
        %v1800 = vadd.f32 0.0, %v1799
        %v1801 = vpop.f32.mrb[0].mxu0
        %1802 = vmatprep.mubr.bf16.mxu0 0
        %1803 = vmatmul.mubr.bf16.gmra.mrb[0].mxu0 %v1717
        %v1804 = vpop.f32.mrb[0].mxu0
        %v1805 = vadd.f32 0.0, %v1804
        %v1806 = vpop.f32.mrb[0].mxu0
        %v1807 = vpop.f32.mrb[0].mxu0
        %v1808 = vadd.f32 0.0, %v1807
        %v1809 = vpop.f32.mrb[0].mxu0
        %1810 = vmatprep.mubr.bf16.mxu0 0
        %1811 = vmatmul.mubr.bf16.gmra.mrb[0].mxu0 %v1720
        %v1812 = vpop.f32.mrb[0].mxu0
        %v1813 = vadd.f32 0.0, %v1812
        %v1814 = vpop.f32.mrb[0].mxu0
        %v1815 = vpop.f32.mrb[0].mxu0
        %v1816 = vadd.f32 0.0, %v1815
        %v1817 = vpop.f32.mrb[0].mxu0
        %1818 = vdwg.mxu0
        %v1819 = vadd.f32 %v1561, %v1757
        %v1820 = vadd.f32 %v1562, %v1760
        %v1821 = vadd.f32 %v1563, %v1765
        %v1822 = vadd.f32 %v1564, %v1768
        %v1823 = vadd.f32 %v1565, %v1773
        %v1824 = vadd.f32 %v1566, %v1776
        %v1825 = vadd.f32 %v1567, %v1781
        %v1826 = vadd.f32 %v1568, %v1784
        %v1827 = vadd.f32 %v1569, %v1789
        %v1828 = vadd.f32 %v1570, %v1792
        %v1829 = vadd.f32 %v1571, %v1797
        %v1830 = vadd.f32 %v1572, %v1800
        %v1831 = vadd.f32 %v1573, %v1805
        %v1832 = vadd.f32 %v1574, %v1808
        %v1833 = vadd.f32 %v1575, %v1813
        %v1834 = vadd.f32 %v1576, %v1816
        %s1835 = sadd.s32 %s185, 2
        %s1836 = smul.u32 %s1835, 3
        %s1837 = smul.addr %s1836, 4
        %s1838 = scalar_lea.vmem %s182, %s1837
        %v1839 = vld [vmem:[%s1838] sm:$0xf]
        %v1840 = vld [vmem:[%s1838 + $0x4] sm:$0xf]
        %v1841 = vld [vmem:[%s1838 + $0xc] sm:$0xf]
        %v1842 = vld [vmem:[%s1838 + $0x10] sm:$0xf]
        %v1843 = vld [vmem:[%s1838 + $0x18] sm:$0xf]
        %v1844 = vld [vmem:[%s1838 + $0x1c] sm:$0xf]
        %v1845 = vld [vmem:[%s1838 + $0x24] sm:$0xf]
        %v1846 = vld [vmem:[%s1838 + $0x28] sm:$0xf]
        %v1847 = vld [vmem:[%s1838 + $0x30] sm:$0xf]
        %v1848 = vld [vmem:[%s1838 + $0x34] sm:$0xf]
        %v1849 = vld [vmem:[%s1838 + $0x3c] sm:$0xf]
        %v1850 = vld [vmem:[%s1838 + $0x40] sm:$0xf]
        %v1851 = vld [vmem:[%s1838 + $0x48] sm:$0xf]
        %v1852 = vld [vmem:[%s1838 + $0x4c] sm:$0xf]
        %v1853 = vld [vmem:[%s1838 + $0x54] sm:$0xf]
        %v1854 = vld [vmem:[%s1838 + $0x58] sm:$0xf]
        %s1855 = scalar_lea.vmem %s1, 48
        %v1856 = vld [vmem:[%s1855] sm:$0xf]
        %v1857 = vld [vmem:[%s1855 + $0x4] sm:$0xf]
        %v1874 = vunpack.c.l.b16 %v1839
        %v1875 = vunpack.c.l.b16 %v1840
        %v1876 = vunpack.c.l.b16 %v1841
        %v1877 = vunpack.c.l.b16 %v1842
        %v1878 = vunpack.c.l.b16 %v1843
        %v1879 = vunpack.c.l.b16 %v1844
        %v1880 = vunpack.c.l.b16 %v1845
        %v1881 = vunpack.c.l.b16 %v1846
        %v1882 = vunpack.c.l.b16 %v1847
        %v1883 = vunpack.c.l.b16 %v1848
        %v1884 = vunpack.c.l.b16 %v1849
        %v1885 = vunpack.c.l.b16 %v1850
        %v1886 = vunpack.c.l.b16 %v1851
        %v1887 = vunpack.c.l.b16 %v1852
        %v1888 = vunpack.c.l.b16 %v1853
        %v1889 = vunpack.c.l.b16 %v1854
        %v1890 = vpack.c.b16 %v1875, %v1874
        %v1891 = vpack.c.b16 %v1877, %v1876
        %v1892 = vpack.c.b16 %v1879, %v1878
        %v1893 = vpack.c.b16 %v1881, %v1880
        %v1894 = vpack.c.b16 %v1883, %v1882
        %v1895 = vpack.c.b16 %v1885, %v1884
        %v1896 = vpack.c.b16 %v1887, %v1886
        %v1897 = vpack.c.b16 %v1889, %v1888
        %v1900 = vunpack.c.l.b16 %v1856
        %v1901 = vunpack.c.l.b16 %v1857
        %v1902 = vpack.c.b16 %v1901, %v1900
        %v1905 = vsel %vm443, %v1890, 0
        %v1908 = vsel %vm443, %v1891, 0
        %v1911 = vsel %vm443, %v1892, 0
        %v1914 = vsel %vm443, %v1893, 0
        %v1917 = vsel %vm443, %v1894, 0
        %v1920 = vsel %vm443, %v1895, 0
        %v1923 = vsel %vm443, %v1896, 0
        %v1926 = vsel %vm443, %v1897, 0
        %1928 = vmatprep.subr.bf16.mxu0 0
        %1929 = vmatpush1.bf16.msra.mxu0 %v1902
        %1930 = vmatprep.subr.bf16.mxu0 0
        %1931 = vmatpush1.bf16.msra.mxu0 0
        %1932 = vmatprep.subr.bf16.mxu0 0
        %1933 = vmatpush1.bf16.msra.mxu0 0
        %1934 = vmatprep.subr.bf16.mxu0 0
        %1935 = vmatpush1.bf16.msra.mxu0 0
        %1936 = vmatprep.subr.bf16.mxu0 0
        %1937 = vmatpush1.bf16.msra.mxu0 0
        %1938 = vmatprep.subr.bf16.mxu0 0
        %1939 = vmatpush1.bf16.msra.mxu0 0
        %1940 = vmatprep.subr.bf16.mxu0 0
        %1941 = vmatpush1.bf16.msra.mxu0 0
        %1942 = vmatprep.subr.bf16.mxu0 0
        %1943 = vmatpush1.bf16.msra.mxu0 0
        %1944 = vmatprep.subr.bf16.mxu0 0
        %1945 = vmatpush1.bf16.msra.mxu0 0
        %1946 = vmatprep.subr.bf16.mxu0 0
        %1947 = vmatpush1.bf16.msra.mxu0 0
        %1948 = vmatprep.subr.bf16.mxu0 0
        %1949 = vmatpush1.bf16.msra.mxu0 0
        %1950 = vmatprep.subr.bf16.mxu0 0
        %1951 = vmatpush1.bf16.msra.mxu0 0
        %1952 = vmatprep.subr.bf16.mxu0 0
        %1953 = vmatpush1.bf16.msra.mxu0 0
        %1954 = vmatprep.subr.bf16.mxu0 0
        %1955 = vmatpush1.bf16.msra.mxu0 0
        %1956 = vmatprep.subr.bf16.mxu0 0
        %1957 = vmatpush1.bf16.msra.mxu0 0
        %1958 = vmatprep.subr.bf16.mxu0 0
        %1959 = vmatpush1.bf16.msra.mxu0 0
        %1960 = vmatprep.mubr.bf16.mxu0 0
        %1961 = vmatmul.mubr.bf16.gmra.mrb[0].mxu0 %v1905
        %v1962 = vpop.f32.mrb[0].mxu0
        %v1963 = vadd.f32 0.0, %v1962
        %v1964 = vpop.f32.mrb[0].mxu0
        %v1965 = vpop.f32.mrb[0].mxu0
        %v1966 = vadd.f32 0.0, %v1965
        %v1967 = vpop.f32.mrb[0].mxu0
        %1968 = vmatprep.mubr.bf16.mxu0 0
        %1969 = vmatmul.mubr.bf16.gmra.mrb[0].mxu0 %v1908
        %v1970 = vpop.f32.mrb[0].mxu0
        %v1971 = vadd.f32 0.0, %v1970
        %v1972 = vpop.f32.mrb[0].mxu0
        %v1973 = vpop.f32.mrb[0].mxu0
        %v1974 = vadd.f32 0.0, %v1973
        %v1975 = vpop.f32.mrb[0].mxu0
        %1976 = vmatprep.mubr.bf16.mxu0 0
        %1977 = vmatmul.mubr.bf16.gmra.mrb[0].mxu0 %v1911
        %v1978 = vpop.f32.mrb[0].mxu0
        %v1979 = vadd.f32 0.0, %v1978
        %v1980 = vpop.f32.mrb[0].mxu0
        %v1981 = vpop.f32.mrb[0].mxu0
        %v1982 = vadd.f32 0.0, %v1981
        %v1983 = vpop.f32.mrb[0].mxu0
        %1984 = vmatprep.mubr.bf16.mxu0 0
        %1985 = vmatmul.mubr.bf16.gmra.mrb[0].mxu0 %v1914
        %v1986 = vpop.f32.mrb[0].mxu0
        %v1987 = vadd.f32 0.0, %v1986
        %v1988 = vpop.f32.mrb[0].mxu0
        %v1989 = vpop.f32.mrb[0].mxu0
        %v1990 = vadd.f32 0.0, %v1989
        %v1991 = vpop.f32.mrb[0].mxu0
        %1992 = vmatprep.mubr.bf16.mxu0 0
        %1993 = vmatmul.mubr.bf16.gmra.mrb[0].mxu0 %v1917
        %v1994 = vpop.f32.mrb[0].mxu0
        %v1995 = vadd.f32 0.0, %v1994
        %v1996 = vpop.f32.mrb[0].mxu0
        %v1997 = vpop.f32.mrb[0].mxu0
        %v1998 = vadd.f32 0.0, %v1997
        %v1999 = vpop.f32.mrb[0].mxu0
        %2000 = vmatprep.mubr.bf16.mxu0 0
        %2001 = vmatmul.mubr.bf16.gmra.mrb[0].mxu0 %v1920
        %v2002 = vpop.f32.mrb[0].mxu0
        %v2003 = vadd.f32 0.0, %v2002
        %v2004 = vpop.f32.mrb[0].mxu0
        %v2005 = vpop.f32.mrb[0].mxu0
        %v2006 = vadd.f32 0.0, %v2005
        %v2007 = vpop.f32.mrb[0].mxu0
        %2008 = vmatprep.mubr.bf16.mxu0 0
        %2009 = vmatmul.mubr.bf16.gmra.mrb[0].mxu0 %v1923
        %v2010 = vpop.f32.mrb[0].mxu0
        %v2011 = vadd.f32 0.0, %v2010
        %v2012 = vpop.f32.mrb[0].mxu0
        %v2013 = vpop.f32.mrb[0].mxu0
        %v2014 = vadd.f32 0.0, %v2013
        %v2015 = vpop.f32.mrb[0].mxu0
        %2016 = vmatprep.mubr.bf16.mxu0 0
        %2017 = vmatmul.mubr.bf16.gmra.mrb[0].mxu0 %v1926
        %v2018 = vpop.f32.mrb[0].mxu0
        %v2019 = vadd.f32 0.0, %v2018
        %v2020 = vpop.f32.mrb[0].mxu0
        %v2021 = vpop.f32.mrb[0].mxu0
        %v2022 = vadd.f32 0.0, %v2021
        %v2023 = vpop.f32.mrb[0].mxu0
        %2024 = vdwg.mxu0
        %v2025 = vadd.f32 %v1819, %v1963
        %v2026 = vadd.f32 %v1820, %v1966
        %v2027 = vadd.f32 %v1821, %v1971
        %v2028 = vadd.f32 %v1822, %v1974
        %v2029 = vadd.f32 %v1823, %v1979
        %v2030 = vadd.f32 %v1824, %v1982
        %v2031 = vadd.f32 %v1825, %v1987
        %v2032 = vadd.f32 %v1826, %v1990
        %v2033 = vadd.f32 %v1827, %v1995
        %v2034 = vadd.f32 %v1828, %v1998
        %v2035 = vadd.f32 %v1829, %v2003
        %v2036 = vadd.f32 %v1830, %v2006
        %v2037 = vadd.f32 %v1831, %v2011
        %v2038 = vadd.f32 %v1832, %v2014
        %v2039 = vadd.f32 %v1833, %v2019
        %v2040 = vadd.f32 %v1834, %v2022
        %v2041 = vld [vmem:[%s1838] sm:$0xf]
        %v2042 = vld [vmem:[%s1838 + $0x4] sm:$0xf]
        %v2043 = vld [vmem:[%s1838 + $0x8] sm:$0x1]
        %v2044 = vld [vmem:[%s1838 + $0xc] sm:$0xf]
        %v2045 = vld [vmem:[%s1838 + $0x10] sm:$0xf]
        %v2046 = vld [vmem:[%s1838 + $0x14] sm:$0x1]
        %v2047 = vld [vmem:[%s1838 + $0x18] sm:$0xf]
        %v2048 = vld [vmem:[%s1838 + $0x1c] sm:$0xf]
        %v2049 = vld [vmem:[%s1838 + $0x20] sm:$0x1]
        %v2050 = vld [vmem:[%s1838 + $0x24] sm:$0xf]
        %v2051 = vld [vmem:[%s1838 + $0x28] sm:$0xf]
        %v2052 = vld [vmem:[%s1838 + $0x2c] sm:$0x1]
        %v2053 = vld [vmem:[%s1838 + $0x30] sm:$0xf]
        %v2054 = vld [vmem:[%s1838 + $0x34] sm:$0xf]
        %v2055 = vld [vmem:[%s1838 + $0x38] sm:$0x1]
        %v2056 = vld [vmem:[%s1838 + $0x3c] sm:$0xf]
        %v2057 = vld [vmem:[%s1838 + $0x40] sm:$0xf]
        %v2058 = vld [vmem:[%s1838 + $0x44] sm:$0x1]
        %v2059 = vld [vmem:[%s1838 + $0x48] sm:$0xf]
        %v2060 = vld [vmem:[%s1838 + $0x4c] sm:$0xf]
        %v2061 = vld [vmem:[%s1838 + $0x50] sm:$0x1]
        %v2062 = vld [vmem:[%s1838 + $0x54] sm:$0xf]
        %v2063 = vld [vmem:[%s1838 + $0x58] sm:$0xf]
        %v2064 = vld [vmem:[%s1838 + $0x5c] sm:$0x1]
        %v2066 = vshrl.u32 %v2041, 16
        %v2068 = vrot.slane %v2066, 4
        %v2069 = vshll.u32 %v2041, 16
        %v2071 = vrot.slane %v2069, 5
        %v2072 = vor.u32 %v2068, %v2071
        %v2073 = vrot.slane %v2072, 4
        %v2075 = vshll.u32 %v2042, 16
        %v2077 = vrot.slane %v2075, 5
        %v2078 = vsel %vm217, %v2073, %v2077
        %v2079 = vshrl.u32 %v2042, 16
        %v2081 = vrot.slane %v2079, 4
        %v2082 = vor.u32 %v2081, %v2077
        %v2083 = vrot.slane %v2082, 4
        %v2085 = vshll.u32 %v2043, 16
        %v2087 = vrot.slane %v2085, 5
        %v2088 = vsel %vm217, %v2083, %v2087
        %v2090 = vshrl.u32 %v2044, 16
        %v2092 = vrot.slane %v2090, 4
        %v2093 = vshll.u32 %v2044, 16
        %v2095 = vrot.slane %v2093, 5
        %v2096 = vor.u32 %v2092, %v2095
        %v2097 = vrot.slane %v2096, 4
        %v2099 = vshll.u32 %v2045, 16
        %v2101 = vrot.slane %v2099, 5
        %v2102 = vsel %vm217, %v2097, %v2101
        %v2103 = vshrl.u32 %v2045, 16
        %v2105 = vrot.slane %v2103, 4
        %v2106 = vor.u32 %v2105, %v2101
        %v2107 = vrot.slane %v2106, 4
        %v2109 = vshll.u32 %v2046, 16
        %v2111 = vrot.slane %v2109, 5
        %v2112 = vsel %vm217, %v2107, %v2111
        %v2114 = vshrl.u32 %v2047, 16
        %v2116 = vrot.slane %v2114, 4
        %v2117 = vshll.u32 %v2047, 16
        %v2119 = vrot.slane %v2117, 5
        %v2120 = vor.u32 %v2116, %v2119
        %v2121 = vrot.slane %v2120, 4
        %v2123 = vshll.u32 %v2048, 16
        %v2125 = vrot.slane %v2123, 5
        %v2126 = vsel %vm217, %v2121, %v2125
        %v2127 = vshrl.u32 %v2048, 16
        %v2129 = vrot.slane %v2127, 4
        %v2130 = vor.u32 %v2129, %v2125
        %v2131 = vrot.slane %v2130, 4
        %v2133 = vshll.u32 %v2049, 16
        %v2135 = vrot.slane %v2133, 5
        %v2136 = vsel %vm217, %v2131, %v2135
        %v2138 = vshrl.u32 %v2050, 16
        %v2140 = vrot.slane %v2138, 4
        %v2141 = vshll.u32 %v2050, 16
        %v2143 = vrot.slane %v2141, 5
        %v2144 = vor.u32 %v2140, %v2143
        %v2145 = vrot.slane %v2144, 4
        %v2147 = vshll.u32 %v2051, 16
        %v2149 = vrot.slane %v2147, 5
        %v2150 = vsel %vm217, %v2145, %v2149
        %v2151 = vshrl.u32 %v2051, 16
        %v2153 = vrot.slane %v2151, 4
        %v2154 = vor.u32 %v2153, %v2149
        %v2155 = vrot.slane %v2154, 4
        %v2157 = vshll.u32 %v2052, 16
        %v2159 = vrot.slane %v2157, 5
        %v2160 = vsel %vm217, %v2155, %v2159
        %v2162 = vshrl.u32 %v2053, 16
        %v2164 = vrot.slane %v2162, 4
        %v2165 = vshll.u32 %v2053, 16
        %v2167 = vrot.slane %v2165, 5
        %v2168 = vor.u32 %v2164, %v2167
        %v2169 = vrot.slane %v2168, 4
        %v2171 = vshll.u32 %v2054, 16
        %v2173 = vrot.slane %v2171, 5
        %v2174 = vsel %vm217, %v2169, %v2173
        %v2175 = vshrl.u32 %v2054, 16
        %v2177 = vrot.slane %v2175, 4
        %v2178 = vor.u32 %v2177, %v2173
        %v2179 = vrot.slane %v2178, 4
        %v2181 = vshll.u32 %v2055, 16
        %v2183 = vrot.slane %v2181, 5
        %v2184 = vsel %vm217, %v2179, %v2183
        %v2186 = vshrl.u32 %v2056, 16
        %v2188 = vrot.slane %v2186, 4
        %v2189 = vshll.u32 %v2056, 16
        %v2191 = vrot.slane %v2189, 5
        %v2192 = vor.u32 %v2188, %v2191
        %v2193 = vrot.slane %v2192, 4
        %v2195 = vshll.u32 %v2057, 16
        %v2197 = vrot.slane %v2195, 5
        %v2198 = vsel %vm217, %v2193, %v2197
        %v2199 = vshrl.u32 %v2057, 16
        %v2201 = vrot.slane %v2199, 4
        %v2202 = vor.u32 %v2201, %v2197
        %v2203 = vrot.slane %v2202, 4
        %v2205 = vshll.u32 %v2058, 16
        %v2207 = vrot.slane %v2205, 5
        %v2208 = vsel %vm217, %v2203, %v2207
        %v2210 = vshrl.u32 %v2059, 16
        %v2212 = vrot.slane %v2210, 4
        %v2213 = vshll.u32 %v2059, 16
        %v2215 = vrot.slane %v2213, 5
        %v2216 = vor.u32 %v2212, %v2215
        %v2217 = vrot.slane %v2216, 4
        %v2219 = vshll.u32 %v2060, 16
        %v2221 = vrot.slane %v2219, 5
        %v2222 = vsel %vm217, %v2217, %v2221
        %v2223 = vshrl.u32 %v2060, 16
        %v2225 = vrot.slane %v2223, 4
        %v2226 = vor.u32 %v2225, %v2221
        %v2227 = vrot.slane %v2226, 4
        %v2229 = vshll.u32 %v2061, 16
        %v2231 = vrot.slane %v2229, 5
        %v2232 = vsel %vm217, %v2227, %v2231
        %v2234 = vshrl.u32 %v2062, 16
        %v2236 = vrot.slane %v2234, 4
        %v2237 = vshll.u32 %v2062, 16
        %v2239 = vrot.slane %v2237, 5
        %v2240 = vor.u32 %v2236, %v2239
        %v2241 = vrot.slane %v2240, 4
        %v2243 = vshll.u32 %v2063, 16
        %v2245 = vrot.slane %v2243, 5
        %v2246 = vsel %vm217, %v2241, %v2245
        %v2247 = vshrl.u32 %v2063, 16
        %v2249 = vrot.slane %v2247, 4
        %v2250 = vor.u32 %v2249, %v2245
        %v2251 = vrot.slane %v2250, 4
        %v2253 = vshll.u32 %v2064, 16
        %v2255 = vrot.slane %v2253, 5
        %v2256 = vsel %vm217, %v2251, %v2255
        %s2257 = scalar_lea.vmem %s1, 56
        %v2258 = vld [vmem:[%s2257] sm:$0xf]
        %v2259 = vld [vmem:[%s2257 + $0x4] sm:$0xf]
        %v2260 = vunpack.c.l.b16 %v2078
        %v2261 = vunpack.c.l.b16 %v2088
        %v2262 = vunpack.c.l.b16 %v2102
        %v2263 = vunpack.c.l.b16 %v2112
        %v2264 = vunpack.c.l.b16 %v2126
        %v2265 = vunpack.c.l.b16 %v2136
        %v2266 = vunpack.c.l.b16 %v2150
        %v2267 = vunpack.c.l.b16 %v2160
        %v2268 = vunpack.c.l.b16 %v2174
        %v2269 = vunpack.c.l.b16 %v2184
        %v2270 = vunpack.c.l.b16 %v2198
        %v2271 = vunpack.c.l.b16 %v2208
        %v2272 = vunpack.c.l.b16 %v2222
        %v2273 = vunpack.c.l.b16 %v2232
        %v2274 = vunpack.c.l.b16 %v2246
        %v2275 = vunpack.c.l.b16 %v2256
        %v2276 = vpack.c.b16 %v2261, %v2260
        %v2277 = vpack.c.b16 %v2263, %v2262
        %v2278 = vpack.c.b16 %v2265, %v2264
        %v2279 = vpack.c.b16 %v2267, %v2266
        %v2280 = vpack.c.b16 %v2269, %v2268
        %v2281 = vpack.c.b16 %v2271, %v2270
        %v2282 = vpack.c.b16 %v2273, %v2272
        %v2283 = vpack.c.b16 %v2275, %v2274
        %v2286 = vunpack.c.l.b16 %v2258
        %v2287 = vunpack.c.l.b16 %v2259
        %v2288 = vpack.c.b16 %v2287, %v2286
        %v2291 = vsel %vm443, %v2276, 0
        %v2294 = vsel %vm443, %v2277, 0
        %v2297 = vsel %vm443, %v2278, 0
        %v2300 = vsel %vm443, %v2279, 0
        %v2303 = vsel %vm443, %v2280, 0
        %v2306 = vsel %vm443, %v2281, 0
        %v2309 = vsel %vm443, %v2282, 0
        %v2312 = vsel %vm443, %v2283, 0
        %2314 = vmatprep.subr.bf16.mxu0 0
        %2315 = vmatpush1.bf16.msra.mxu0 %v2288
        %2316 = vmatprep.subr.bf16.mxu0 0
        %2317 = vmatpush1.bf16.msra.mxu0 0
        %2318 = vmatprep.subr.bf16.mxu0 0
        %2319 = vmatpush1.bf16.msra.mxu0 0
        %2320 = vmatprep.subr.bf16.mxu0 0
        %2321 = vmatpush1.bf16.msra.mxu0 0
        %2322 = vmatprep.subr.bf16.mxu0 0
        %2323 = vmatpush1.bf16.msra.mxu0 0
        %2324 = vmatprep.subr.bf16.mxu0 0
        %2325 = vmatpush1.bf16.msra.mxu0 0
        %2326 = vmatprep.subr.bf16.mxu0 0
        %2327 = vmatpush1.bf16.msra.mxu0 0
        %2328 = vmatprep.subr.bf16.mxu0 0
        %2329 = vmatpush1.bf16.msra.mxu0 0
        %2330 = vmatprep.subr.bf16.mxu0 0
        %2331 = vmatpush1.bf16.msra.mxu0 0
        %2332 = vmatprep.subr.bf16.mxu0 0
        %2333 = vmatpush1.bf16.msra.mxu0 0
        %2334 = vmatprep.subr.bf16.mxu0 0
        %2335 = vmatpush1.bf16.msra.mxu0 0
        %2336 = vmatprep.subr.bf16.mxu0 0
        %2337 = vmatpush1.bf16.msra.mxu0 0
        %2338 = vmatprep.subr.bf16.mxu0 0
        %2339 = vmatpush1.bf16.msra.mxu0 0
        %2340 = vmatprep.subr.bf16.mxu0 0
        %2341 = vmatpush1.bf16.msra.mxu0 0
        %2342 = vmatprep.subr.bf16.mxu0 0
        %2343 = vmatpush1.bf16.msra.mxu0 0
        %2344 = vmatprep.subr.bf16.mxu0 0
        %2345 = vmatpush1.bf16.msra.mxu0 0
        %2346 = vmatprep.mubr.bf16.mxu0 0
        %2347 = vmatmul.mubr.bf16.gmra.mrb[0].mxu0 %v2291
        %v2348 = vpop.f32.mrb[0].mxu0
        %v2349 = vadd.f32 0.0, %v2348
        %v2350 = vpop.f32.mrb[0].mxu0
        %v2351 = vpop.f32.mrb[0].mxu0
        %v2352 = vadd.f32 0.0, %v2351
        %v2353 = vpop.f32.mrb[0].mxu0
        %2354 = vmatprep.mubr.bf16.mxu0 0
        %2355 = vmatmul.mubr.bf16.gmra.mrb[0].mxu0 %v2294
        %v2356 = vpop.f32.mrb[0].mxu0
        %v2357 = vadd.f32 0.0, %v2356
        %v2358 = vpop.f32.mrb[0].mxu0
        %v2359 = vpop.f32.mrb[0].mxu0
        %v2360 = vadd.f32 0.0, %v2359
        %v2361 = vpop.f32.mrb[0].mxu0
        %2362 = vmatprep.mubr.bf16.mxu0 0
        %2363 = vmatmul.mubr.bf16.gmra.mrb[0].mxu0 %v2297
        %v2364 = vpop.f32.mrb[0].mxu0
        %v2365 = vadd.f32 0.0, %v2364
        %v2366 = vpop.f32.mrb[0].mxu0
        %v2367 = vpop.f32.mrb[0].mxu0
        %v2368 = vadd.f32 0.0, %v2367
        %v2369 = vpop.f32.mrb[0].mxu0
        %2370 = vmatprep.mubr.bf16.mxu0 0
        %2371 = vmatmul.mubr.bf16.gmra.mrb[0].mxu0 %v2300
        %v2372 = vpop.f32.mrb[0].mxu0
        %v2373 = vadd.f32 0.0, %v2372
        %v2374 = vpop.f32.mrb[0].mxu0
        %v2375 = vpop.f32.mrb[0].mxu0
        %v2376 = vadd.f32 0.0, %v2375
        %v2377 = vpop.f32.mrb[0].mxu0
        %2378 = vmatprep.mubr.bf16.mxu0 0
        %2379 = vmatmul.mubr.bf16.gmra.mrb[0].mxu0 %v2303
        %v2380 = vpop.f32.mrb[0].mxu0
        %v2381 = vadd.f32 0.0, %v2380
        %v2382 = vpop.f32.mrb[0].mxu0
        %v2383 = vpop.f32.mrb[0].mxu0
        %v2384 = vadd.f32 0.0, %v2383
        %v2385 = vpop.f32.mrb[0].mxu0
        %2386 = vmatprep.mubr.bf16.mxu0 0
        %2387 = vmatmul.mubr.bf16.gmra.mrb[0].mxu0 %v2306
        %v2388 = vpop.f32.mrb[0].mxu0
        %v2389 = vadd.f32 0.0, %v2388
        %v2390 = vpop.f32.mrb[0].mxu0
        %v2391 = vpop.f32.mrb[0].mxu0
        %v2392 = vadd.f32 0.0, %v2391
        %v2393 = vpop.f32.mrb[0].mxu0
        %2394 = vmatprep.mubr.bf16.mxu0 0
        %2395 = vmatmul.mubr.bf16.gmra.mrb[0].mxu0 %v2309
        %v2396 = vpop.f32.mrb[0].mxu0
        %v2397 = vadd.f32 0.0, %v2396
        %v2398 = vpop.f32.mrb[0].mxu0
        %v2399 = vpop.f32.mrb[0].mxu0
        %v2400 = vadd.f32 0.0, %v2399
        %v2401 = vpop.f32.mrb[0].mxu0
        %2402 = vmatprep.mubr.bf16.mxu0 0
        %2403 = vmatmul.mubr.bf16.gmra.mrb[0].mxu0 %v2312
        %v2404 = vpop.f32.mrb[0].mxu0
        %v2405 = vadd.f32 0.0, %v2404
        %v2406 = vpop.f32.mrb[0].mxu0
        %v2407 = vpop.f32.mrb[0].mxu0
        %v2408 = vadd.f32 0.0, %v2407
        %v2409 = vpop.f32.mrb[0].mxu0
        %2410 = vdwg.mxu0
        %v2411 = vadd.f32 %v2025, %v2349
        %v2412 = vadd.f32 %v2026, %v2352
        %v2413 = vadd.f32 %v2027, %v2357
        %v2414 = vadd.f32 %v2028, %v2360
        %v2415 = vadd.f32 %v2029, %v2365
        %v2416 = vadd.f32 %v2030, %v2368
        %v2417 = vadd.f32 %v2031, %v2373
        %v2418 = vadd.f32 %v2032, %v2376
        %v2419 = vadd.f32 %v2033, %v2381
        %v2420 = vadd.f32 %v2034, %v2384
        %v2421 = vadd.f32 %v2035, %v2389
        %v2422 = vadd.f32 %v2036, %v2392
        %v2423 = vadd.f32 %v2037, %v2397
        %v2424 = vadd.f32 %v2038, %v2400
        %v2425 = vadd.f32 %v2039, %v2405
        %v2426 = vadd.f32 %v2040, %v2408
        %v2427 = vld [vmem:[%s1838] sm:$0xe]
        %v2428 = vld [vmem:[%s1838 + $0xc] sm:$0xe]
        %v2429 = vld [vmem:[%s1838 + $0x18] sm:$0xe]
        %v2430 = vld [vmem:[%s1838 + $0x24] sm:$0xe]
        %v2431 = vld [vmem:[%s1838 + $0x30] sm:$0xe]
        %v2432 = vld [vmem:[%s1838 + $0x3c] sm:$0xe]
        %v2433 = vld [vmem:[%s1838 + $0x48] sm:$0xe]
        %v2434 = vld [vmem:[%s1838 + $0x54] sm:$0xe]
        %v2459 = vrot.slane %v2427, 5
        %v2460 = vrot.slane %v2459, 4
        %v2461 = vrot.slane %v2042, 5
        %v2462 = vsel %vm758, %v2460, %v2461
        %v2463 = vrot.slane %v2461, 4
        %v2464 = vrot.slane %v2043, 5
        %v2465 = vsel %vm758, %v2463, %v2464
        %v2466 = vrot.slane %v2428, 5
        %v2467 = vrot.slane %v2466, 4
        %v2468 = vrot.slane %v2045, 5
        %v2469 = vsel %vm758, %v2467, %v2468
        %v2470 = vrot.slane %v2468, 4
        %v2471 = vrot.slane %v2046, 5
        %v2472 = vsel %vm758, %v2470, %v2471
        %v2473 = vrot.slane %v2429, 5
        %v2474 = vrot.slane %v2473, 4
        %v2475 = vrot.slane %v2048, 5
        %v2476 = vsel %vm758, %v2474, %v2475
        %v2477 = vrot.slane %v2475, 4
        %v2478 = vrot.slane %v2049, 5
        %v2479 = vsel %vm758, %v2477, %v2478
        %v2480 = vrot.slane %v2430, 5
        %v2481 = vrot.slane %v2480, 4
        %v2482 = vrot.slane %v2051, 5
        %v2483 = vsel %vm758, %v2481, %v2482
        %v2484 = vrot.slane %v2482, 4
        %v2485 = vrot.slane %v2052, 5
        %v2486 = vsel %vm758, %v2484, %v2485
        %v2487 = vrot.slane %v2431, 5
        %v2488 = vrot.slane %v2487, 4
        %v2489 = vrot.slane %v2054, 5
        %v2490 = vsel %vm758, %v2488, %v2489
        %v2491 = vrot.slane %v2489, 4
        %v2492 = vrot.slane %v2055, 5
        %v2493 = vsel %vm758, %v2491, %v2492
        %v2494 = vrot.slane %v2432, 5
        %v2495 = vrot.slane %v2494, 4
        %v2496 = vrot.slane %v2057, 5
        %v2497 = vsel %vm758, %v2495, %v2496
        %v2498 = vrot.slane %v2496, 4
        %v2499 = vrot.slane %v2058, 5
        %v2500 = vsel %vm758, %v2498, %v2499
        %v2501 = vrot.slane %v2433, 5
        %v2502 = vrot.slane %v2501, 4
        %v2503 = vrot.slane %v2060, 5
        %v2504 = vsel %vm758, %v2502, %v2503
        %v2505 = vrot.slane %v2503, 4
        %v2506 = vrot.slane %v2061, 5
        %v2507 = vsel %vm758, %v2505, %v2506
        %v2508 = vrot.slane %v2434, 5
        %v2509 = vrot.slane %v2508, 4
        %v2510 = vrot.slane %v2063, 5
        %v2511 = vsel %vm758, %v2509, %v2510
        %v2512 = vrot.slane %v2510, 4
        %v2513 = vrot.slane %v2064, 5
        %v2514 = vsel %vm758, %v2512, %v2513
        %s2515 = scalar_lea.vmem %s1, 64
        %v2516 = vld [vmem:[%s2515] sm:$0xf]
        %v2517 = vld [vmem:[%s2515 + $0x4] sm:$0xf]
        %v2518 = vunpack.c.l.b16 %v2462
        %v2519 = vunpack.c.l.b16 %v2465
        %v2520 = vunpack.c.l.b16 %v2469
        %v2521 = vunpack.c.l.b16 %v2472
        %v2522 = vunpack.c.l.b16 %v2476
        %v2523 = vunpack.c.l.b16 %v2479
        %v2524 = vunpack.c.l.b16 %v2483
        %v2525 = vunpack.c.l.b16 %v2486
        %v2526 = vunpack.c.l.b16 %v2490
        %v2527 = vunpack.c.l.b16 %v2493
        %v2528 = vunpack.c.l.b16 %v2497
        %v2529 = vunpack.c.l.b16 %v2500
        %v2530 = vunpack.c.l.b16 %v2504
        %v2531 = vunpack.c.l.b16 %v2507
        %v2532 = vunpack.c.l.b16 %v2511
        %v2533 = vunpack.c.l.b16 %v2514
        %v2534 = vpack.c.b16 %v2519, %v2518
        %v2535 = vpack.c.b16 %v2521, %v2520
        %v2536 = vpack.c.b16 %v2523, %v2522
        %v2537 = vpack.c.b16 %v2525, %v2524
        %v2538 = vpack.c.b16 %v2527, %v2526
        %v2539 = vpack.c.b16 %v2529, %v2528
        %v2540 = vpack.c.b16 %v2531, %v2530
        %v2541 = vpack.c.b16 %v2533, %v2532
        %v2544 = vunpack.c.l.b16 %v2516
        %v2545 = vunpack.c.l.b16 %v2517
        %v2546 = vpack.c.b16 %v2545, %v2544
        %v2549 = vsel %vm443, %v2534, 0
        %v2552 = vsel %vm443, %v2535, 0
        %v2555 = vsel %vm443, %v2536, 0
        %v2558 = vsel %vm443, %v2537, 0
        %v2561 = vsel %vm443, %v2538, 0
        %v2564 = vsel %vm443, %v2539, 0
        %v2567 = vsel %vm443, %v2540, 0
        %v2570 = vsel %vm443, %v2541, 0
        %2572 = vmatprep.subr.bf16.mxu0 0
        %2573 = vmatpush1.bf16.msra.mxu0 %v2546
        %2574 = vmatprep.subr.bf16.mxu0 0
        %2575 = vmatpush1.bf16.msra.mxu0 0
        %2576 = vmatprep.subr.bf16.mxu0 0
        %2577 = vmatpush1.bf16.msra.mxu0 0
        %2578 = vmatprep.subr.bf16.mxu0 0
        %2579 = vmatpush1.bf16.msra.mxu0 0
        %2580 = vmatprep.subr.bf16.mxu0 0
        %2581 = vmatpush1.bf16.msra.mxu0 0
        %2582 = vmatprep.subr.bf16.mxu0 0
        %2583 = vmatpush1.bf16.msra.mxu0 0
        %2584 = vmatprep.subr.bf16.mxu0 0
        %2585 = vmatpush1.bf16.msra.mxu0 0
        %2586 = vmatprep.subr.bf16.mxu0 0
        %2587 = vmatpush1.bf16.msra.mxu0 0
        %2588 = vmatprep.subr.bf16.mxu0 0
        %2589 = vmatpush1.bf16.msra.mxu0 0
        %2590 = vmatprep.subr.bf16.mxu0 0
        %2591 = vmatpush1.bf16.msra.mxu0 0
        %2592 = vmatprep.subr.bf16.mxu0 0
        %2593 = vmatpush1.bf16.msra.mxu0 0
        %2594 = vmatprep.subr.bf16.mxu0 0
        %2595 = vmatpush1.bf16.msra.mxu0 0
        %2596 = vmatprep.subr.bf16.mxu0 0
        %2597 = vmatpush1.bf16.msra.mxu0 0
        %2598 = vmatprep.subr.bf16.mxu0 0
        %2599 = vmatpush1.bf16.msra.mxu0 0
        %2600 = vmatprep.subr.bf16.mxu0 0
        %2601 = vmatpush1.bf16.msra.mxu0 0
        %2602 = vmatprep.subr.bf16.mxu0 0
        %2603 = vmatpush1.bf16.msra.mxu0 0
        %2604 = vmatprep.mubr.bf16.mxu0 0
        %2605 = vmatmul.mubr.bf16.gmra.mrb[0].mxu0 %v2549
        %v2606 = vpop.f32.mrb[0].mxu0
        %v2607 = vadd.f32 0.0, %v2606
        %v2608 = vpop.f32.mrb[0].mxu0
        %v2609 = vpop.f32.mrb[0].mxu0
        %v2610 = vadd.f32 0.0, %v2609
        %v2611 = vpop.f32.mrb[0].mxu0
        %2612 = vmatprep.mubr.bf16.mxu0 0
        %2613 = vmatmul.mubr.bf16.gmra.mrb[0].mxu0 %v2552
        %v2614 = vpop.f32.mrb[0].mxu0
        %v2615 = vadd.f32 0.0, %v2614
        %v2616 = vpop.f32.mrb[0].mxu0
        %v2617 = vpop.f32.mrb[0].mxu0
        %v2618 = vadd.f32 0.0, %v2617
        %v2619 = vpop.f32.mrb[0].mxu0
        %2620 = vmatprep.mubr.bf16.mxu0 0
        %2621 = vmatmul.mubr.bf16.gmra.mrb[0].mxu0 %v2555
        %v2622 = vpop.f32.mrb[0].mxu0
        %v2623 = vadd.f32 0.0, %v2622
        %v2624 = vpop.f32.mrb[0].mxu0
        %v2625 = vpop.f32.mrb[0].mxu0
        %v2626 = vadd.f32 0.0, %v2625
        %v2627 = vpop.f32.mrb[0].mxu0
        %2628 = vmatprep.mubr.bf16.mxu0 0
        %2629 = vmatmul.mubr.bf16.gmra.mrb[0].mxu0 %v2558
        %v2630 = vpop.f32.mrb[0].mxu0
        %v2631 = vadd.f32 0.0, %v2630
        %v2632 = vpop.f32.mrb[0].mxu0
        %v2633 = vpop.f32.mrb[0].mxu0
        %v2634 = vadd.f32 0.0, %v2633
        %v2635 = vpop.f32.mrb[0].mxu0
        %2636 = vmatprep.mubr.bf16.mxu0 0
        %2637 = vmatmul.mubr.bf16.gmra.mrb[0].mxu0 %v2561
        %v2638 = vpop.f32.mrb[0].mxu0
        %v2639 = vadd.f32 0.0, %v2638
        %v2640 = vpop.f32.mrb[0].mxu0
        %v2641 = vpop.f32.mrb[0].mxu0
        %v2642 = vadd.f32 0.0, %v2641
        %v2643 = vpop.f32.mrb[0].mxu0
        %2644 = vmatprep.mubr.bf16.mxu0 0
        %2645 = vmatmul.mubr.bf16.gmra.mrb[0].mxu0 %v2564
        %v2646 = vpop.f32.mrb[0].mxu0
        %v2647 = vadd.f32 0.0, %v2646
        %v2648 = vpop.f32.mrb[0].mxu0
        %v2649 = vpop.f32.mrb[0].mxu0
        %v2650 = vadd.f32 0.0, %v2649
        %v2651 = vpop.f32.mrb[0].mxu0
        %2652 = vmatprep.mubr.bf16.mxu0 0
        %2653 = vmatmul.mubr.bf16.gmra.mrb[0].mxu0 %v2567
        %v2654 = vpop.f32.mrb[0].mxu0
        %v2655 = vadd.f32 0.0, %v2654
        %v2656 = vpop.f32.mrb[0].mxu0
        %v2657 = vpop.f32.mrb[0].mxu0
        %v2658 = vadd.f32 0.0, %v2657
        %v2659 = vpop.f32.mrb[0].mxu0
        %2660 = vmatprep.mubr.bf16.mxu0 0
        %2661 = vmatmul.mubr.bf16.gmra.mrb[0].mxu0 %v2570
        %v2662 = vpop.f32.mrb[0].mxu0
        %v2663 = vadd.f32 0.0, %v2662
        %v2664 = vpop.f32.mrb[0].mxu0
        %v2665 = vpop.f32.mrb[0].mxu0
        %v2666 = vadd.f32 0.0, %v2665
        %v2667 = vpop.f32.mrb[0].mxu0
        %2668 = vdwg.mxu0
        %v2669 = vadd.f32 %v2411, %v2607
        %v2670 = vadd.f32 %v2412, %v2610
        %v2671 = vadd.f32 %v2413, %v2615
        %v2672 = vadd.f32 %v2414, %v2618
        %v2673 = vadd.f32 %v2415, %v2623
        %v2674 = vadd.f32 %v2416, %v2626
        %v2675 = vadd.f32 %v2417, %v2631
        %v2676 = vadd.f32 %v2418, %v2634
        %v2677 = vadd.f32 %v2419, %v2639
        %v2678 = vadd.f32 %v2420, %v2642
        %v2679 = vadd.f32 %v2421, %v2647
        %v2680 = vadd.f32 %v2422, %v2650
        %v2681 = vadd.f32 %v2423, %v2655
        %v2682 = vadd.f32 %v2424, %v2658
        %v2683 = vadd.f32 %v2425, %v2663
        %v2684 = vadd.f32 %v2426, %v2666
        %v2685 = vld [vmem:[%s2] sm:$0x1]
        %v2687 = vlaneseq
        %v2688 = vshrl.u32 %v2687, 7
        %v2689 = vsub.s32 0, %v2688
        %v2690 = vrot.slane %v2685, %v2689
        %v2692 = vadd.f32 %v2669, %v2690
        %v2693 = vadd.f32 %v2670, %v2690
        %v2694 = vadd.f32 %v2671, %v2690
        %v2695 = vadd.f32 %v2672, %v2690
        %v2696 = vadd.f32 %v2673, %v2690
        %v2697 = vadd.f32 %v2674, %v2690
        %v2698 = vadd.f32 %v2675, %v2690
        %v2699 = vadd.f32 %v2676, %v2690
        %v2700 = vadd.f32 %v2677, %v2690
        %v2701 = vadd.f32 %v2678, %v2690
        %v2702 = vadd.f32 %v2679, %v2690
        %v2703 = vadd.f32 %v2680, %v2690
        %v2704 = vadd.f32 %v2681, %v2690
        %v2705 = vadd.f32 %v2682, %v2690
        %v2706 = vadd.f32 %v2683, %v2690
        %v2707 = vadd.f32 %v2684, %v2690
        %2708 = vst [vmem:[%s177] sm:$0xff] %v2692
        %2709 = vst [vmem:[%s177 + $0x8] sm:$0xff] %v2693
        %2710 = vst [vmem:[%s177 + $0x10] sm:$0xff] %v2694
        %2711 = vst [vmem:[%s177 + $0x18] sm:$0xff] %v2695
        %2712 = vst [vmem:[%s177 + $0x20] sm:$0xff] %v2696
        %2713 = vst [vmem:[%s177 + $0x28] sm:$0xff] %v2697
        %2714 = vst [vmem:[%s177 + $0x30] sm:$0xff] %v2698
        %2715 = vst [vmem:[%s177 + $0x38] sm:$0xff] %v2699
        %2716 = vst [vmem:[%s177 + $0x40] sm:$0xff] %v2700
        %2717 = vst [vmem:[%s177 + $0x48] sm:$0xff] %v2701
        %2718 = vst [vmem:[%s177 + $0x50] sm:$0xff] %v2702
        %2719 = vst [vmem:[%s177 + $0x58] sm:$0xff] %v2703
        %2720 = vst [vmem:[%s177 + $0x60] sm:$0xff] %v2704
        %2721 = vst [vmem:[%s177 + $0x68] sm:$0xff] %v2705
        %2722 = vst [vmem:[%s177 + $0x70] sm:$0xff] %v2706
        %2723 = vst [vmem:[%s177 + $0x78] sm:$0xff] %v2707
        %s2724 = sand.u32 %s107, 1
        %s2725 = scalar_lea.sflag [#allocation3], %s2724
        %s2726 = sand.u32 %s107, 1
        %s2727 = smul.addr %s2726, 128
        %s2728 = scalar_lea.vmem [#allocation2], %s2727
        // Predicated region
        $region33: #{tpu_custom_call.1} parent=31 // pred_check
          %p2729 = pneg %p117
        $region34: #{tpu_custom_call.1} parent=31 // pred_check_branch
          %2731 = sbr.rel (%p2729) target = $region36
        $region35: #{tpu_custom_call.1} parent=31 // pred_region
          %s2732 = smul.u32 16, %s22
          %s2734 = ssub.s32 2048, 2048
          %2735 = vsyncadd %s2725, %s2734
          %s2736 = smul.addr %s21, 32
          %s2737 = sadd.s32 %s2732, %s2736
          %s2738 = smul.addr %s2737, 128
          %s2739 = scalar_lea.hbm %s3, %s2738
          %s2740 = sshll.u32 %s2728, 4
          %s2741 = int_to_ptr.vmem [resolvable:$true] %s2740
          %2746 = dma.vmem_to_hbm [thread:$0]  %s2741, 2048, %s2739, %s2725, 128, 128, 8
        $region36: #{tpu_custom_call.1} parent=31 // pred_fallthru
          _
      $region32: #{tpu_custom_call.1} parent=5 // pred_fallthru
        _
      %p2747 = scmp.le.s32.totalorder 2, %s12
      // Predicated region
      $region37: #{tpu_custom_call.1} parent=5 // pred_check
        %p2748 = pneg %p2747
      $region38: #{tpu_custom_call.1} parent=5 // pred_check_branch
        %2750 = sbr.rel (%p2748) target = $region40
      $region39: #{tpu_custom_call.1} parent=5 // pred_region
        %s2751 = ssub.s32 %s12, 2
        // Predicated region
        $region41: #{tpu_custom_call.1} parent=39 // pred_check
          %p2752 = pneg %p123
        $region42: #{tpu_custom_call.1} parent=39 // pred_check_branch
          %2754 = sbr.rel (%p2752) target = $region44
        $region43: #{tpu_custom_call.1} parent=39 // pred_region
          %s2755 = sand.u32 %s108, 1
          %s2756 = scalar_lea.sflag [#allocation3], %s2755
          %s2757 = sand.u32 %s108, 1
          %s2758 = smul.addr %s2757, 128
          %s2759 = scalar_lea.vmem [#allocation2], %s2758
          %2760 = dma.done %s2756, 2048
        $region44: #{tpu_custom_call.1} parent=39 // pred_fallthru
          _
      $region40: #{tpu_custom_call.1} parent=5 // pred_fallthru
        _
    $region6: #{tpu_custom_call.1} parent=1 // loop_footer
      %s16 = sadd.s32 1, %s12
    $region7: #{tpu_custom_call.1} parent=1 // loop_footer_branch
      %11 = sbr.rel target = $region3
    $region8: #{tpu_custom_call.1} parent=1 // loop_exit
      _
    %2761 = vsyncpa [#allocation3], 1
    %s2762 = scalar_lea.sflag [#allocation3], 1
    %2763 = vsyncpa %s2762, 1

</llo_original>
